<compile_context>
chip_gen: v7x
topology: tpu7x:2x2x1
jax: 0.10.0
libtpu: 0.0.40
codegen_flags: <defaults>
</compile_context>

<pallas_src>
import functools

import jax
import jax.numpy as jnp
from jax import lax
from jax.experimental import pallas as pl
from jax.experimental.pallas import tpu as pltpu

NEG_SLOPE = 0.2                  # nn.LeakyReLU(0.2)
BN_EPS = 1e-5                    # nn.BatchNorm2d default eps
LANE = 128                       # TPU lane width
VMEM_LIMIT_BYTES = 48 * 1024 * 1024   # within v7x's 64 MiB; fine on v5e/v6e


def _pick_row_tile(total, cap=1024):
    """Row tile for the elementwise pass: whole extent if small, else the
    largest multiple-of-8 divisor of `total` not exceeding `cap`."""
    if total <= cap:
        return total
    for cand in range(cap - (cap % 8), 7, -8):
        if total % cand == 0:
            return cand
    return total


# --------------------------------------------------------------------------
# Kernel A: direct convolution (scratch-assembled im2col, single matmul per
# image) + per-image BN partial sums.
#   grid = (N,)  -- fully parallel (per-image outputs, no shared accumulators)
# --------------------------------------------------------------------------
def conv_stats_kernel(x_ref, w_ref, y_ref, stats_ref, patch_ref,
                      *, k_size, stride, out_h, out_w):
    """Per grid step (one image):
      x_ref:     (1, HP, WP, CIN)  f32   zero-padded NHWC input
      w_ref:     (KKC, CP)         bf16  weights, (kh, kw, cin)-major, Cout padded
      y_ref:     (1, OH*OW, CP)    bf16  conv output (pre-BN), flat rows
      stats_ref: (1, 2, CP)        f32   row 0 = sum(y), row 1 = sum(y*y)
      patch_ref: (OH*OW, KKC)      f32   VMEM scratch: im2col patch matrix
    """
    cin = x_ref.shape[-1]
    k = k_size

    # One shifted slab per kernel tap: each (OH, OW, CIN) window of the padded
    # image fills its KKC column range of the patch matrix.  k*k slab writes
    # per image; no per-output-row work, no lane-axis concatenate.
    for kh in range(k):
        for kw in range(k):
            col = (kh * k + kw) * cin
            if stride == 1:
                slab = x_ref[0, kh:kh + out_h, kw:kw + out_w, :]
            else:  # strided windows (not exercised by the demo shapes)
                slab = x_ref[0, pl.ds(kh, out_h, stride=stride),
                             pl.ds(kw, out_w, stride=stride), :]
            patch_ref[:, col:col + cin] = slab.reshape(out_h * out_w, cin)

    # Single bf16 MXU matmul per image, f32 accumulation: (OH*OW, KKC)x(KKC, CP).
    yfull = jnp.dot(patch_ref[...].astype(jnp.bfloat16), w_ref[...],
                    preferred_element_type=jnp.float32)          # (OH*OW, CP)
    y_ref[0] = yfull.astype(y_ref.dtype)                         # lane-dense store

    # BatchNorm batch-stat partial sums, once per image, from the f32 result.
    stats_ref[0, 0:1, :] = jnp.sum(yfull, axis=0, keepdims=True)
    stats_ref[0, 1:2, :] = jnp.sum(yfull * yfull, axis=0, keepdims=True)


# --------------------------------------------------------------------------
# Kernel B: y * scale + shift, then LeakyReLU(0.2), with the channel slice and
# f32 cast done in-kernel so no CP-wide epilogue pass is needed.
# --------------------------------------------------------------------------
def bn_lrelu_kernel(y_ref, scale_ref, shift_ref, o_ref):
    """y_ref: (1, RT, CP) bf16; scale/shift: (1, CP) f32; o_ref: (1, RT, COUT) f32."""
    z = y_ref[0].astype(jnp.float32) * scale_ref[...] + shift_ref[...]
    z = jnp.where(z >= 0.0, z, NEG_SLOPE * z)
    o_ref[0] = z[:, :o_ref.shape[-1]]     # drop channel padding, store f32


# --------------------------------------------------------------------------
# Host-side glue.
# --------------------------------------------------------------------------
def conv_block_forward(x_nchw, w, b, gamma, beta, *, k_size, stride=1):
    """x_nchw: (N, Cin, H, W); w: (Cout, Cin, K, K); b/gamma/beta: (Cout,).

    `b` is accepted for interface fidelity but unused: a per-channel conv bias
    is exactly cancelled by train-mode BatchNorm (mean subtraction)."""
    del b
    pad = 1 if k_size == 3 else 0
    n, cin, h, wd = x_nchw.shape
    cout = w.shape[0]
    oh = (h + 2 * pad - k_size) // stride + 1
    ow = (wd + 2 * pad - k_size) // stride + 1
    ohw = oh * ow
    hp, wp = h + 2 * pad, wd + 2 * pad
    kkc = k_size * k_size * cin
    cp = ((cout + LANE - 1) // LANE) * LANE            # Cout padded to lane width

    # NCHW -> padded NHWC (one fused XLA pass over the small input).
    x_nhwc = jnp.transpose(x_nchw.astype(jnp.float32), (0, 2, 3, 1))
    xp = jnp.pad(x_nhwc, ((0, 0), (pad, pad), (pad, pad), (0, 0)))

    # Weights: (Cout, Cin, K, K) -> (K*K*Cin, Cout) in (kh, kw, cin) order,
    # zero-padded to 128 output lanes, bf16 for the MXU.
    w2d = jnp.transpose(w.astype(jnp.float32), (2, 3, 1, 0)).reshape(kkc, cout)
    w2d = jnp.pad(w2d, ((0, 0), (0, cp - cout))).astype(jnp.bfloat16)

    # ---- kernel A: conv (scratch im2col, one matmul/image) + BN partials ----
    y, stats = pl.pallas_call(
        functools.partial(conv_stats_kernel, k_size=k_size, stride=stride,
                          out_h=oh, out_w=ow),
        out_shape=(
            jax.ShapeDtypeStruct((n, ohw, cp), jnp.bfloat16),
            jax.ShapeDtypeStruct((n, 2, cp), jnp.float32),
        ),
        grid_spec=pltpu.PrefetchScalarGridSpec(
            num_scalar_prefetch=0,
            grid=(n,),
            in_specs=[
                pl.BlockSpec((1, hp, wp, cin), lambda i: (i, 0, 0, 0)),
                pl.BlockSpec((kkc, cp), lambda i: (0, 0)),   # constant, small
            ],
            out_specs=(
                pl.BlockSpec((1, ohw, cp), lambda i: (i, 0, 0)),
                pl.BlockSpec((1, 2, cp), lambda i: (i, 0, 0)),
            ),
            scratch_shapes=[pltpu.VMEM((ohw, kkc), jnp.float32)],
        ),
        compiler_params=pltpu.CompilerParams(
            dimension_semantics=("parallel",),          # v7x: both TCs usable
            vmem_limit_bytes=VMEM_LIMIT_BYTES),
    )(xp, w2d)

    # ---- reduce partial stats and fold BN into one FMA (tiny device ops) ----
    m_total = float(n * ohw)
    total_sum = jnp.sum(stats[:, 0, :], axis=0)        # (cp,)
    total_sq = jnp.sum(stats[:, 1, :], axis=0)         # (cp,)
    mean = total_sum / m_total
    var = total_sq / m_total - mean * mean             # biased var (BN train mode)
    gamma_p = jnp.pad(gamma.astype(jnp.float32), (0, cp - cout))
    beta_p = jnp.pad(beta.astype(jnp.float32), (0, cp - cout))
    scale = gamma_p * lax.rsqrt(var + BN_EPS)
    shift = beta_p - mean * scale
    scale2 = scale.reshape(1, cp)
    shift2 = shift.reshape(1, cp)

    # ---- kernel B: BN affine + LeakyReLU + in-kernel channel slice ----
    rt = _pick_row_tile(ohw)                           # lane-dense row tile
    out_flat = pl.pallas_call(
        bn_lrelu_kernel,
        out_shape=jax.ShapeDtypeStruct((n, ohw, cout), jnp.float32),
        grid_spec=pltpu.PrefetchScalarGridSpec(
            num_scalar_prefetch=0,
            grid=(n, ohw // rt),
            in_specs=[
                pl.BlockSpec((1, rt, cp), lambda i, t: (i, t, 0)),
                pl.BlockSpec((1, cp), lambda i, t: (0, 0)),
                pl.BlockSpec((1, cp), lambda i, t: (0, 0)),
            ],
            out_specs=pl.BlockSpec((1, rt, cout), lambda i, t: (i, t, 0)),
        ),
        compiler_params=pltpu.CompilerParams(
            dimension_semantics=("parallel", "parallel"),
            vmem_limit_bytes=VMEM_LIMIT_BYTES),
    )(y, scale2, shift2)

    # Only the Cout-wide NHWC->NCHW transpose remains in XLA (required by the
    # module's NCHW interface); the CP-wide f32 round trip of v2 is gone.
    return jnp.transpose(out_flat, (0, 2, 1)).reshape(n, cout, oh, ow)


# --------------------------------------------------------------------------
# Pure-JAX reference (same semantics as the PyTorch module in train mode,
# including the conv bias — which BN cancels exactly).
# --------------------------------------------------------------------------
def reference_forward(x, w, b, gamma, beta, *, k_size, stride=1):
    pad = 1 if k_size == 3 else 0
    y = lax.conv_general_dilated(
        x, w, (stride, stride), [(pad, pad), (pad, pad)],
        dimension_numbers=("NCHW", "OIHW", "NCHW"))
    y = y + b[None, :, None, None]
    mean = jnp.mean(y, axis=(0, 2, 3), keepdims=True)
    var = jnp.mean((y - mean) ** 2, axis=(0, 2, 3), keepdims=True)
    y_hat = (y - mean) / jnp.sqrt(var + BN_EPS)
    z = y_hat * gamma[None, :, None, None] + beta[None, :, None, None]
    return jnp.where(z >= 0, z, NEG_SLOPE * z)


if __name__ == "__main__":
    # Small deterministic problem: batch=2, Cin=4, H=W=16, Cout=8, k=3, stride=1
    N, CIN, H, W = 2, 4, 16, 16
    COUT, K, STRIDE = 8, 3, 1

    key = jax.random.PRNGKey(0)
    kx, kw_, kb, kg, kbe = jax.random.split(key, 5)
    x = jax.random.normal(kx, (N, CIN, H, W), dtype=jnp.float32)
    w = jax.random.normal(kw_, (COUT, CIN, K, K), dtype=jnp.float32) * 0.1
    b = jax.random.normal(kb, (COUT,), dtype=jnp.float32) * 0.1
    gamma = 1.0 + 0.1 * jax.random.normal(kg, (COUT,), dtype=jnp.float32)
    beta = 0.1 * jax.random.normal(kbe, (COUT,), dtype=jnp.float32)

    out = conv_block_forward(x, w, b, gamma, beta, k_size=K, stride=STRIDE)
    out = jax.block_until_ready(out)

    ref = reference_forward(x, w, b, gamma, beta, k_size=K, stride=STRIDE)
    ref = jax.block_until_ready(ref)

    assert out.shape == ref.shape == (N, COUT, H, W)
    # Tolerance reflects the bf16 MXU path / bf16 conv intermediate (BN stats
    # are f32, but the affine is applied to the bf16-rounded y).
    if not jnp.allclose(out, ref, rtol=3e-2, atol=3e-2):
        max_err = float(jnp.max(jnp.abs(out - ref)))
        raise AssertionError(
            f"Pallas ConvBlock does not match reference (max abs err {max_err})")
    print("KERNEL_OK")
</pallas_src>

<mosaic_0001>
module attributes {stable_mosaic.version = 11 : i64} {
  func.func @conv_stats_kernel(%arg0: i32, %arg1: memref<1x18x18x4xf32, #tpu.memory_space<vmem>>, %arg2: memref<36x128xbf16, #tpu.memory_space<vmem>>, %arg3: memref<1x256x128xbf16, #tpu.memory_space<vmem>>, %arg4: memref<1x2x128xf32, #tpu.memory_space<vmem>>, %arg5: memref<256x36xf32, #tpu.memory_space<vmem>>) attributes {dimension_semantics = [#tpu.dimension_semantics<parallel>], iteration_bounds = array<i64: 2>, scalar_prefetch = 0 : i64, scratch_operands = 1 : i64, tpu.core_type = #tpu.core_type<tc>, window_params = [{transform_indices = @transform_0, window_bounds = array<i64: 1, 18, 18, 4>}, {pipeline_mode = #tpu.pipeline_mode<synchronous>, transform_indices = @transform_1, window_bounds = array<i64: 36, 128>}, {transform_indices = @transform_2, window_bounds = array<i64: 1, 256, 128>}, {transform_indices = @transform_3, window_bounds = array<i64: 1, 2, 128>}]} {
    %c0 = arith.constant 0 : index
    %c0_0 = arith.constant 0 : index
    %c0_1 = arith.constant 0 : index
    %c0_2 = arith.constant 0 : index
    %0 = vector.load %arg1[%c0, %c0_0, %c0_1, %c0_2] : memref<1x18x18x4xf32, #tpu.memory_space<vmem>>, vector<1x16x16x4xf32>
    %1 = vector.shape_cast %0 : vector<1x16x16x4xf32> to vector<16x16x4xf32>
    %2 = vector.shape_cast %1 : vector<16x16x4xf32> to vector<256x4xf32>
    %c0_3 = arith.constant 0 : index
    %c0_4 = arith.constant 0 : index
    %3 = vector.load %arg5[%c0_3, %c0_4] : memref<256x36xf32, #tpu.memory_space<vmem>>, vector<256x4xf32>
    tpu.vector_store %arg5[%c0_3, %c0_4], %2 {strides = array<i32>} : memref<256x36xf32, #tpu.memory_space<vmem>>, vector<256x4xf32>,
    %c0_5 = arith.constant 0 : index
    %c0_6 = arith.constant 0 : index
    %c1 = arith.constant 1 : index
    %c0_7 = arith.constant 0 : index
    %4 = vector.load %arg1[%c0_5, %c0_6, %c1, %c0_7] : memref<1x18x18x4xf32, #tpu.memory_space<vmem>>, vector<1x16x16x4xf32>
    %5 = vector.shape_cast %4 : vector<1x16x16x4xf32> to vector<16x16x4xf32>
    %6 = vector.shape_cast %5 : vector<16x16x4xf32> to vector<256x4xf32>
    %c0_8 = arith.constant 0 : index
    %c4 = arith.constant 4 : index
    %7 = vector.load %arg5[%c0_8, %c4] : memref<256x36xf32, #tpu.memory_space<vmem>>, vector<256x4xf32>
    tpu.vector_store %arg5[%c0_8, %c4], %6 {strides = array<i32>} : memref<256x36xf32, #tpu.memory_space<vmem>>, vector<256x4xf32>,
    %c0_9 = arith.constant 0 : index
    %c0_10 = arith.constant 0 : index
    %c2 = arith.constant 2 : index
    %c0_11 = arith.constant 0 : index
    %8 = vector.load %arg1[%c0_9, %c0_10, %c2, %c0_11] : memref<1x18x18x4xf32, #tpu.memory_space<vmem>>, vector<1x16x16x4xf32>
    %9 = vector.shape_cast %8 : vector<1x16x16x4xf32> to vector<16x16x4xf32>
    %10 = vector.shape_cast %9 : vector<16x16x4xf32> to vector<256x4xf32>
    %c0_12 = arith.constant 0 : index
    %c8 = arith.constant 8 : index
    %11 = vector.load %arg5[%c0_12, %c8] : memref<256x36xf32, #tpu.memory_space<vmem>>, vector<256x4xf32>
    tpu.vector_store %arg5[%c0_12, %c8], %10 {strides = array<i32>} : memref<256x36xf32, #tpu.memory_space<vmem>>, vector<256x4xf32>,
    %c0_13 = arith.constant 0 : index
    %c1_14 = arith.constant 1 : index
    %c0_15 = arith.constant 0 : index
    %c0_16 = arith.constant 0 : index
    %12 = vector.load %arg1[%c0_13, %c1_14, %c0_15, %c0_16] : memref<1x18x18x4xf32, #tpu.memory_space<vmem>>, vector<1x16x16x4xf32>
    %13 = vector.shape_cast %12 : vector<1x16x16x4xf32> to vector<16x16x4xf32>
    %14 = vector.shape_cast %13 : vector<16x16x4xf32> to vector<256x4xf32>
    %c0_17 = arith.constant 0 : index
    %c12 = arith.constant 12 : index
    %15 = vector.load %arg5[%c0_17, %c12] : memref<256x36xf32, #tpu.memory_space<vmem>>, vector<256x4xf32>
    tpu.vector_store %arg5[%c0_17, %c12], %14 {strides = array<i32>} : memref<256x36xf32, #tpu.memory_space<vmem>>, vector<256x4xf32>,
    %c0_18 = arith.constant 0 : index
    %c1_19 = arith.constant 1 : index
    %c1_20 = arith.constant 1 : index
    %c0_21 = arith.constant 0 : index
    %16 = vector.load %arg1[%c0_18, %c1_19, %c1_20, %c0_21] : memref<1x18x18x4xf32, #tpu.memory_space<vmem>>, vector<1x16x16x4xf32>
    %17 = vector.shape_cast %16 : vector<1x16x16x4xf32> to vector<16x16x4xf32>
    %18 = vector.shape_cast %17 : vector<16x16x4xf32> to vector<256x4xf32>
    %c0_22 = arith.constant 0 : index
    %c16 = arith.constant 16 : index
    %19 = vector.load %arg5[%c0_22, %c16] : memref<256x36xf32, #tpu.memory_space<vmem>>, vector<256x4xf32>
    tpu.vector_store %arg5[%c0_22, %c16], %18 {strides = array<i32>} : memref<256x36xf32, #tpu.memory_space<vmem>>, vector<256x4xf32>,
    %c0_23 = arith.constant 0 : index
    %c1_24 = arith.constant 1 : index
    %c2_25 = arith.constant 2 : index
    %c0_26 = arith.constant 0 : index
    %20 = vector.load %arg1[%c0_23, %c1_24, %c2_25, %c0_26] : memref<1x18x18x4xf32, #tpu.memory_space<vmem>>, vector<1x16x16x4xf32>
    %21 = vector.shape_cast %20 : vector<1x16x16x4xf32> to vector<16x16x4xf32>
    %22 = vector.shape_cast %21 : vector<16x16x4xf32> to vector<256x4xf32>
    %c0_27 = arith.constant 0 : index
    %c20 = arith.constant 20 : index
    %23 = vector.load %arg5[%c0_27, %c20] : memref<256x36xf32, #tpu.memory_space<vmem>>, vector<256x4xf32>
    tpu.vector_store %arg5[%c0_27, %c20], %22 {strides = array<i32>} : memref<256x36xf32, #tpu.memory_space<vmem>>, vector<256x4xf32>,
    %c0_28 = arith.constant 0 : index
    %c2_29 = arith.constant 2 : index
    %c0_30 = arith.constant 0 : index
    %c0_31 = arith.constant 0 : index
    %24 = vector.load %arg1[%c0_28, %c2_29, %c0_30, %c0_31] : memref<1x18x18x4xf32, #tpu.memory_space<vmem>>, vector<1x16x16x4xf32>
    %25 = vector.shape_cast %24 : vector<1x16x16x4xf32> to vector<16x16x4xf32>
    %26 = vector.shape_cast %25 : vector<16x16x4xf32> to vector<256x4xf32>
    %c0_32 = arith.constant 0 : index
    %c24 = arith.constant 24 : index
    %27 = vector.load %arg5[%c0_32, %c24] : memref<256x36xf32, #tpu.memory_space<vmem>>, vector<256x4xf32>
    tpu.vector_store %arg5[%c0_32, %c24], %26 {strides = array<i32>} : memref<256x36xf32, #tpu.memory_space<vmem>>, vector<256x4xf32>,
    %c0_33 = arith.constant 0 : index
    %c2_34 = arith.constant 2 : index
    %c1_35 = arith.constant 1 : index
    %c0_36 = arith.constant 0 : index
    %28 = vector.load %arg1[%c0_33, %c2_34, %c1_35, %c0_36] : memref<1x18x18x4xf32, #tpu.memory_space<vmem>>, vector<1x16x16x4xf32>
    %29 = vector.shape_cast %28 : vector<1x16x16x4xf32> to vector<16x16x4xf32>
    %30 = vector.shape_cast %29 : vector<16x16x4xf32> to vector<256x4xf32>
    %c0_37 = arith.constant 0 : index
    %c28 = arith.constant 28 : index
    %31 = vector.load %arg5[%c0_37, %c28] : memref<256x36xf32, #tpu.memory_space<vmem>>, vector<256x4xf32>
    tpu.vector_store %arg5[%c0_37, %c28], %30 {strides = array<i32>} : memref<256x36xf32, #tpu.memory_space<vmem>>, vector<256x4xf32>,
    %c0_38 = arith.constant 0 : index
    %c2_39 = arith.constant 2 : index
    %c2_40 = arith.constant 2 : index
    %c0_41 = arith.constant 0 : index
    %32 = vector.load %arg1[%c0_38, %c2_39, %c2_40, %c0_41] : memref<1x18x18x4xf32, #tpu.memory_space<vmem>>, vector<1x16x16x4xf32>
    %33 = vector.shape_cast %32 : vector<1x16x16x4xf32> to vector<16x16x4xf32>
    %34 = vector.shape_cast %33 : vector<16x16x4xf32> to vector<256x4xf32>
    %c0_42 = arith.constant 0 : index
    %c32 = arith.constant 32 : index
    %35 = vector.load %arg5[%c0_42, %c32] : memref<256x36xf32, #tpu.memory_space<vmem>>, vector<256x4xf32>
    tpu.vector_store %arg5[%c0_42, %c32], %34 {strides = array<i32>} : memref<256x36xf32, #tpu.memory_space<vmem>>, vector<256x4xf32>,
    %c0_43 = arith.constant 0 : index
    %c0_44 = arith.constant 0 : index
    %36 = vector.load %arg5[%c0_43, %c0_44] : memref<256x36xf32, #tpu.memory_space<vmem>>, vector<256x36xf32>
    %37 = arith.truncf %36 : vector<256x36xf32> to vector<256x36xbf16>
    %c0_45 = arith.constant 0 : index
    %c0_46 = arith.constant 0 : index
    %38 = vector.load %arg2[%c0_45, %c0_46] : memref<36x128xbf16, #tpu.memory_space<vmem>>, vector<36x128xbf16>
    %cst = arith.constant dense<0.000000e+00> : vector<256x128xf32>
    %39 = tpu.matmul %37, %38, %cst {dimension_numbers = #tpu.dot_dimension_numbers<[1], [0], [0], [1], [0, 0, 1, 1], [], []>} : vector<256x36xbf16>, vector<36x128xbf16>, vector<256x128xf32> -> vector<256x128xf32>
    %40 = arith.truncf %39 : vector<256x128xf32> to vector<256x128xbf16>
    %c0_47 = arith.constant 0 : index
    %c0_48 = arith.constant 0 : index
    %c0_49 = arith.constant 0 : index
    %41 = vector.load %arg3[%c0_47, %c0_48, %c0_49] : memref<1x256x128xbf16, #tpu.memory_space<vmem>>, vector<1x256x128xbf16>
    %42 = vector.shape_cast %41 : vector<1x256x128xbf16> to vector<256x128xbf16>
    %43 = vector.shape_cast %40 : vector<256x128xbf16> to vector<1x256x128xbf16>
    tpu.vector_store %arg3[%c0_47, %c0_48, %c0_49], %43 {strides = array<i32>} : memref<1x256x128xbf16, #tpu.memory_space<vmem>>, vector<1x256x128xbf16>,
    %cst_50 = arith.constant dense<0.000000e+00> : vector<128xf32>
    %44 = vector.multi_reduction <add>, %39, %cst_50 [0] : vector<256x128xf32> to vector<128xf32>
    %45 = vector.shape_cast %44 : vector<128xf32> to vector<1x128xf32>
    %c0_51 = arith.constant 0 : index
    %c0_52 = arith.constant 0 : index
    %c0_53 = arith.constant 0 : index
    %46 = vector.load %arg4[%c0_51, %c0_52, %c0_53] : memref<1x2x128xf32, #tpu.memory_space<vmem>>, vector<1x1x128xf32>
    %47 = vector.shape_cast %46 : vector<1x1x128xf32> to vector<1x128xf32>
    %48 = vector.shape_cast %45 : vector<1x128xf32> to vector<1x1x128xf32>
    tpu.vector_store %arg4[%c0_51, %c0_52, %c0_53], %48 {strides = array<i32>} : memref<1x2x128xf32, #tpu.memory_space<vmem>>, vector<1x1x128xf32>,
    %49 = arith.mulf %39, %39 : vector<256x128xf32>
    %cst_54 = arith.constant dense<0.000000e+00> : vector<128xf32>
    %50 = vector.multi_reduction <add>, %49, %cst_54 [0] : vector<256x128xf32> to vector<128xf32>
    %51 = vector.shape_cast %50 : vector<128xf32> to vector<1x128xf32>
    %c0_55 = arith.constant 0 : index
    %c1_56 = arith.constant 1 : index
    %c0_57 = arith.constant 0 : index
    %52 = vector.load %arg4[%c0_55, %c1_56, %c0_57] : memref<1x2x128xf32, #tpu.memory_space<vmem>>, vector<1x1x128xf32>
    %53 = vector.shape_cast %52 : vector<1x1x128xf32> to vector<1x128xf32>
    %54 = vector.shape_cast %51 : vector<1x128xf32> to vector<1x1x128xf32>
    tpu.vector_store %arg4[%c0_55, %c1_56, %c0_57], %54 {strides = array<i32>} : memref<1x2x128xf32, #tpu.memory_space<vmem>>, vector<1x1x128xf32>,
    return
  }
  func.func @transform_0(%arg0: i32) -> (i32, i32, i32, i32) {
    %c0_i32 = arith.constant 0 : i32
    %c0_i32_0 = arith.constant 0 : i32
    %c0_i32_1 = arith.constant 0 : i32
    %c0_i32_2 = arith.constant 0 : i32
    return %arg0, %c0_i32, %c0_i32_0, %c0_i32_1 : i32, i32, i32, i32
  }
  func.func @transform_1(%arg0: i32) -> (i32, i32) {
    %c0_i32 = arith.constant 0 : i32
    %c0_i32_0 = arith.constant 0 : i32
    %c0_i32_1 = arith.constant 0 : i32
    return %c0_i32, %c0_i32_0 : i32, i32
  }
  func.func @transform_2(%arg0: i32) -> (i32, i32, i32) {
    %c0_i32 = arith.constant 0 : i32
    %c0_i32_0 = arith.constant 0 : i32
    %c0_i32_1 = arith.constant 0 : i32
    return %arg0, %c0_i32, %c0_i32_0 : i32, i32, i32
  }
  func.func @transform_3(%arg0: i32) -> (i32, i32, i32) {
    %c0_i32 = arith.constant 0 : i32
    %c0_i32_0 = arith.constant 0 : i32
    %c0_i32_1 = arith.constant 0 : i32
    return %arg0, %c0_i32, %c0_i32_0 : i32, i32, i32
  }
}

</mosaic_0001>

<llo_original>
// kernel: tpu_custom_call.1
$region0: #{tpu_custom_call.1}
  #allocation0 [shape = 'u32[]', space=smem, size = 0x4, offset = 0x4, fixed_abs, tag = 'smem constant byte address 0x4 - core index']
  #allocation1 [shape = 'u32[144,128]{1,0:T(1,128)}', space=vmem, size = 0x12000, scoped, tag = 'internal scratch']
  #allocation2 [shape = 'f32[256,36]{1,0:T(8,128)}', space=vmem, size = 0x20000, scoped, tag = 'scratch operand']
  %s0 = inlined_call_operand.vmem [shape: f32[2,18,18,4], index: 0, kind: input, shape index: {}]
  %s1 = inlined_call_operand.vmem [shape: bf16[36,128], index: 1, kind: input, shape index: {}]
  %s2 = inlined_call_operand.hbm [shape: bf16[2,256,128], index: 2, kind: output, shape index: {0}]
  %s3 = inlined_call_operand.hbm [shape: f32[2,2,128], index: 3, kind: output, shape index: {1}]
  %4 = xla_tuple %s2, %s3
  %s5 = sld [smem:[#allocation0]]
  $region49: #{tpu_custom_call.1} parent=0
    _
  %s7 = ssub.s32 1, %s5
  %s8 = scalar_select 0, %s7, %s5
  $region1: #{tpu_custom_call.1} parent=0
    #allocation3 [shape = 'u8[131072]{0}', space=vmem, size = 0x20000, scoped, tag = 'output window, operand 0']
    #allocation4 [shape = 's32[2]{0}', space=sflag, size = 0x8, scoped, tag = 'scoped memory for tpu_custom_call.1']
    #allocation5 [shape = 'u8[2048]{0}', space=vmem, size = 0x800, scoped, tag = 'output window, operand 1']
    #allocation6 [shape = 's32[2]{0}', space=sflag, size = 0x8, scoped, tag = 'scoped memory for tpu_custom_call.1']
    %9 = vsyncpa [#allocation4], 0
    %s10 = scalar_lea.sflag [#allocation4], 1
    %11 = vsyncpa %s10, 0
    %12 = vsyncpa [#allocation6], 0
    %s13 = scalar_lea.sflag [#allocation6], 1
    %14 = vsyncpa %s13, 0
    loop: start=0, step=1, limit=4
    $region2: #{tpu_custom_call.1} parent=1 // loop_pre_header
      _
    $region3: #{tpu_custom_call.1} parent=1 // loop_header
      %s16 = sphi 0, %s20
      %p17 = scmp.ge.s32.totalorder %s16, 4
      %s26 = sphi 0, %s28
      %s29 = sphi 0, %s26
      %s30 = sphi 0, %s29
      %s46 = sphi 0, %s30
      %s50 = sphi 0, %s50
      %s52 = sphi 0, %s50
      %s53 = sphi 0, %s52
      %s67 = sphi 0, %s53
      %s73 = sphi 0, %s75
      %s76 = sphi 0, %s73
      %s77 = sphi 0, %s76
      %s93 = sphi 0, %s77
      %s99 = sphi 0, %s101
      %s102 = sphi 0, %s99
      %s103 = sphi 0, %s102
      %s119 = sphi 0, %s103
    $region4: #{tpu_custom_call.1} parent=1 // loop_header_branch
      %19 = sbr.rel (%p17) target = $region8
    $region5: #{tpu_custom_call.1} parent=1 // loop_body
      %s21 = ssub.s32 %s16, 1
      %s22 = ssub.s32 %s16, 2
      %s23 = sadd.s32 %s16, 1
      %s24 = ssub.s32 %s16, %s23
      %p25 = scmp.eq.s32.totalorder %s24, 0
      %s27 = sadd.s32 %s26, 1
      %s28 = scalar_select %p25, %s26, %s27
      %p31 = pneg %p25
      %p32 = scmp.eq.s32.totalorder %s16, 1
      %p33 = por %p31, %p32
      %p34 = scmp.ne.s32.totalorder %s26, %s29
      %p35 = scmp.eq.s32.totalorder %s16, 0
      %p36 = por %p34, %p35
      %p37 = scmp.ne.s32.totalorder %s26, %s29
      %p38 = scmp.eq.s32.totalorder %s21, 1
      %p39 = por %p37, %p38
      %p40 = scmp.ne.s32.totalorder %s29, %s30
      %p41 = scmp.eq.s32.totalorder %s21, 0
      %p42 = por %p40, %p41
      %p43 = scmp.ne.s32.totalorder %s29, %s30
      %p44 = scmp.eq.s32.totalorder %s22, 1
      %p45 = por %p43, %p44
      %p47 = scmp.ne.s32.totalorder %s30, %s46
      %p48 = scmp.eq.s32.totalorder %s22, 0
      %p49 = por %p47, %p48
      %s51 = sadd.s32 %s50, 1
      %p54 = scmp.eq.s32.totalorder %s16, 1
      %p55 = scmp.ne.s32.totalorder %s50, %s52
      %p56 = scmp.eq.s32.totalorder %s16, 0
      %p57 = por %p55, %p56
      %p58 = scmp.ne.s32.totalorder %s50, %s52
      %p59 = scmp.eq.s32.totalorder %s21, 1
      %p60 = por %p58, %p59
      %p61 = scmp.ne.s32.totalorder %s52, %s53
      %p62 = scmp.eq.s32.totalorder %s21, 0
      %p63 = por %p61, %p62
      %p64 = scmp.ne.s32.totalorder %s52, %s53
      %p65 = scmp.eq.s32.totalorder %s22, 1
      %p66 = por %p64, %p65
      %p68 = scmp.ne.s32.totalorder %s53, %s67
      %p69 = scmp.eq.s32.totalorder %s22, 0
      %p70 = por %p68, %p69
      %s71 = ssub.s32 %s16, %s23
      %p72 = scmp.eq.s32.totalorder %s71, 0
      %s74 = sadd.s32 %s73, 1
      %s75 = scalar_select %p72, %s73, %s74
      %p78 = pneg %p72
      %p79 = scmp.eq.s32.totalorder %s16, 1
      %p80 = por %p78, %p79
      %p81 = scmp.ne.s32.totalorder %s73, %s76
      %p82 = scmp.eq.s32.totalorder %s16, 0
      %p83 = por %p81, %p82
      %p84 = scmp.ne.s32.totalorder %s73, %s76
      %p85 = scmp.eq.s32.totalorder %s21, 1
      %p86 = por %p84, %p85
      %p87 = scmp.ne.s32.totalorder %s76, %s77
      %p88 = scmp.eq.s32.totalorder %s21, 0
      %p89 = por %p87, %p88
      %p90 = scmp.ne.s32.totalorder %s76, %s77
      %p91 = scmp.eq.s32.totalorder %s22, 1
      %p92 = por %p90, %p91
      %p94 = scmp.ne.s32.totalorder %s77, %s93
      %p95 = scmp.eq.s32.totalorder %s22, 0
      %p96 = por %p94, %p95
      %s97 = ssub.s32 %s16, %s23
      %p98 = scmp.eq.s32.totalorder %s97, 0
      %s100 = sadd.s32 %s99, 1
      %s101 = scalar_select %p98, %s99, %s100
      %p104 = pneg %p98
      %p105 = scmp.eq.s32.totalorder %s16, 1
      %p106 = por %p104, %p105
      %p107 = scmp.ne.s32.totalorder %s99, %s102
      %p108 = scmp.eq.s32.totalorder %s16, 0
      %p109 = por %p107, %p108
      %p110 = scmp.ne.s32.totalorder %s99, %s102
      %p111 = scmp.eq.s32.totalorder %s21, 1
      %p112 = por %p110, %p111
      %p113 = scmp.ne.s32.totalorder %s102, %s103
      %p114 = scmp.eq.s32.totalorder %s21, 0
      %p115 = por %p113, %p114
      %p116 = scmp.ne.s32.totalorder %s102, %s103
      %p117 = scmp.eq.s32.totalorder %s22, 1
      %p118 = por %p116, %p117
      %p120 = scmp.ne.s32.totalorder %s103, %s119
      %p121 = scmp.eq.s32.totalorder %s22, 0
      %p122 = por %p120, %p121
      %p123 = scmp.le.s32.totalorder 1, %s16
      %p124 = scmp.lt.s32.totalorder %s16, 3
      %p125 = pnand %p123, %p124
      %p126 = pneg %p125
      // Predicated region
      $region9: #{tpu_custom_call.1} parent=5 // pred_check
        _
      $region10: #{tpu_custom_call.1} parent=5 // pred_check_branch
        %128 = sbr.rel (%p125) target = $region12
      $region11: #{tpu_custom_call.1} parent=5 // pred_region
        %s129 = ssub.s32 %s16, 1
        // Predicated region
        $region13: #{tpu_custom_call.1} parent=11 // pred_check
          %p130 = pneg %p63
        $region14: #{tpu_custom_call.1} parent=11 // pred_check_branch
          %132 = sbr.rel (%p130) target = $region16
        $region15: #{tpu_custom_call.1} parent=11 // pred_region
          _
        $region16: #{tpu_custom_call.1} parent=11 // pred_fallthru
          _
      $region12: #{tpu_custom_call.1} parent=5 // pred_fallthru
        _
      %p133 = scmp.lt.s32.totalorder %s16, 2
      // Predicated region
      $region17: #{tpu_custom_call.1} parent=5 // pred_check
        %p134 = pneg %p133
      $region18: #{tpu_custom_call.1} parent=5 // pred_check_branch
        %136 = sbr.rel (%p134) target = $region20
      $region19: #{tpu_custom_call.1} parent=5 // pred_region
        // Predicated region
        $region21: #{tpu_custom_call.1} parent=19 // pred_check
          %p137 = pneg %p36
        $region22: #{tpu_custom_call.1} parent=19 // pred_check_branch
          %139 = sbr.rel (%p137) target = $region24
        $region23: #{tpu_custom_call.1} parent=19 // pred_region
          %p140 = scmp.lt.s32.totalorder %s16, 1
          %s141 = scalar_select %p140, %s16, 1
          %s142 = smul.addr %s141, 54
          %s143 = smul.addr %s142, 8
          %s144 = scalar_lea.vmem %s0, %s143
        $region24: #{tpu_custom_call.1} parent=19 // pred_fallthru
          _
      $region20: #{tpu_custom_call.1} parent=5 // pred_fallthru
        _
      %p145 = scmp.le.s32.totalorder 1, %s16
      %p146 = scmp.lt.s32.totalorder %s16, 3
      %p147 = pnand %p145, %p146
      %p148 = pneg %p147
      // Predicated region
      $region25: #{tpu_custom_call.1} parent=5 // pred_check
        _
      $region26: #{tpu_custom_call.1} parent=5 // pred_check_branch
        %150 = sbr.rel (%p147) target = $region28
      $region27: #{tpu_custom_call.1} parent=5 // pred_region
        %s151 = ssub.s32 %s16, 1
        %p152 = scmp.lt.s32.totalorder %s21, 1
        %s153 = scalar_select %p152, %s21, 1
        %s154 = smul.addr %s153, 54
        %s155 = smul.addr %s154, 8
        %s156 = scalar_lea.vmem %s0, %s155
        %p157 = pneg %p42
        %p158 = pneg %p39
        %p159 = pneg %p63
        %p160 = pneg %p60
        %p161 = pneg %p89
        %p162 = pneg %p86
        %s163 = sand.u32 %s76, 1
        %s164 = scalar_lea.sflag [#allocation4], %s163
        %s165 = sand.u32 %s76, 1
        %s166 = smul.addr %s165, 128
        %s167 = scalar_lea.vmem [#allocation3], %s166
        %p168 = pneg %p115
        %p169 = pneg %p112
        %s170 = sand.u32 %s102, 1
        %s171 = scalar_lea.sflag [#allocation6], %s170
        %s172 = sand.u32 %s102, 1
        %s173 = smul.addr %s172, 2
        %s174 = scalar_lea.vmem [#allocation5], %s173
        %p175 = scmp.lt.s32.totalorder %s21, 1
        %s176 = scalar_select %p175, %s21, 1
        %s177 = smul.addr %s176, 54
        %s178 = smul.addr %s177, 8
        %s179 = scalar_lea.vmem %s0, %s178
        %v181 = vld [vmem:[%s179] sm:$0xff]
        %v182 = vld [vmem:[%s179 + $0x8] sm:$0xff]
        %v183 = vld [vmem:[%s179 + $0x18] sm:$0xff]
        %v184 = vld [vmem:[%s179 + $0x20] sm:$0xff]
        %v185 = vld [vmem:[%s179 + $0x30] sm:$0xff]
        %v186 = vld [vmem:[%s179 + $0x38] sm:$0xff]
        %v187 = vld [vmem:[%s179 + $0x48] sm:$0xff]
        %v188 = vld [vmem:[%s179 + $0x50] sm:$0xff]
        %v189 = vld [vmem:[%s179 + $0x60] sm:$0xff]
        %v190 = vld [vmem:[%s179 + $0x68] sm:$0xff]
        %v191 = vld [vmem:[%s179 + $0x78] sm:$0xff]
        %v192 = vld [vmem:[%s179 + $0x80] sm:$0xff]
        %v193 = vld [vmem:[%s179 + $0x90] sm:$0xff]
        %v194 = vld [vmem:[%s179 + $0x98] sm:$0xff]
        %v195 = vld [vmem:[%s179 + $0xa8] sm:$0xff]
        %v196 = vld [vmem:[%s179 + $0xb0] sm:$0xff]
        %v197 = vld [vmem:[%s179 + $0xc0] sm:$0xff]
        %v198 = vld [vmem:[%s179 + $0xc8] sm:$0xff]
        %v199 = vld [vmem:[%s179 + $0xd8] sm:$0xff]
        %v200 = vld [vmem:[%s179 + $0xe0] sm:$0xff]
        %v201 = vld [vmem:[%s179 + $0xf0] sm:$0xff]
        %v202 = vld [vmem:[%s179 + $0xf8] sm:$0xff]
        %v203 = vld [vmem:[%s179 + $0x108] sm:$0xff]
        %v204 = vld [vmem:[%s179 + $0x110] sm:$0xff]
        %v205 = vld [vmem:[%s179 + $0x120] sm:$0xff]
        %v206 = vld [vmem:[%s179 + $0x128] sm:$0xff]
        %v207 = vld [vmem:[%s179 + $0x138] sm:$0xff]
        %v208 = vld [vmem:[%s179 + $0x140] sm:$0xff]
        %v209 = vld [vmem:[%s179 + $0x150] sm:$0xff]
        %v210 = vld [vmem:[%s179 + $0x158] sm:$0xff]
        %v211 = vld [vmem:[%s179 + $0x168] sm:$0xff]
        %v212 = vld [vmem:[%s179 + $0x170] sm:$0xff]
        %vm213 = vcmask 31744
        %214 = vst.msk [vmem:[#allocation2] sm:$0xff] %vm213, %v181
        %215 = vst.msk [vmem:[#allocation2 + $0x8] sm:$0xff] %vm213, %v182
        %216 = vst.msk [vmem:[#allocation2 + $0x10] sm:$0xff] %vm213, %v183
        %217 = vst.msk [vmem:[#allocation2 + $0x18] sm:$0xff] %vm213, %v184
        %218 = vst.msk [vmem:[#allocation2 + $0x20] sm:$0xff] %vm213, %v185
        %219 = vst.msk [vmem:[#allocation2 + $0x28] sm:$0xff] %vm213, %v186
        %220 = vst.msk [vmem:[#allocation2 + $0x30] sm:$0xff] %vm213, %v187
        %221 = vst.msk [vmem:[#allocation2 + $0x38] sm:$0xff] %vm213, %v188
        %222 = vst.msk [vmem:[#allocation2 + $0x40] sm:$0xff] %vm213, %v189
        %223 = vst.msk [vmem:[#allocation2 + $0x48] sm:$0xff] %vm213, %v190
        %224 = vst.msk [vmem:[#allocation2 + $0x50] sm:$0xff] %vm213, %v191
        %225 = vst.msk [vmem:[#allocation2 + $0x58] sm:$0xff] %vm213, %v192
        %226 = vst.msk [vmem:[#allocation2 + $0x60] sm:$0xff] %vm213, %v193
        %227 = vst.msk [vmem:[#allocation2 + $0x68] sm:$0xff] %vm213, %v194
        %228 = vst.msk [vmem:[#allocation2 + $0x70] sm:$0xff] %vm213, %v195
        %229 = vst.msk [vmem:[#allocation2 + $0x78] sm:$0xff] %vm213, %v196
        %230 = vst.msk [vmem:[#allocation2 + $0x80] sm:$0xff] %vm213, %v197
        %231 = vst.msk [vmem:[#allocation2 + $0x88] sm:$0xff] %vm213, %v198
        %232 = vst.msk [vmem:[#allocation2 + $0x90] sm:$0xff] %vm213, %v199
        %233 = vst.msk [vmem:[#allocation2 + $0x98] sm:$0xff] %vm213, %v200
        %234 = vst.msk [vmem:[#allocation2 + $0xa0] sm:$0xff] %vm213, %v201
        %235 = vst.msk [vmem:[#allocation2 + $0xa8] sm:$0xff] %vm213, %v202
        %236 = vst.msk [vmem:[#allocation2 + $0xb0] sm:$0xff] %vm213, %v203
        %237 = vst.msk [vmem:[#allocation2 + $0xb8] sm:$0xff] %vm213, %v204
        %238 = vst.msk [vmem:[#allocation2 + $0xc0] sm:$0xff] %vm213, %v205
        %239 = vst.msk [vmem:[#allocation2 + $0xc8] sm:$0xff] %vm213, %v206
        %240 = vst.msk [vmem:[#allocation2 + $0xd0] sm:$0xff] %vm213, %v207
        %241 = vst.msk [vmem:[#allocation2 + $0xd8] sm:$0xff] %vm213, %v208
        %242 = vst.msk [vmem:[#allocation2 + $0xe0] sm:$0xff] %vm213, %v209
        %243 = vst.msk [vmem:[#allocation2 + $0xe8] sm:$0xff] %vm213, %v210
        %244 = vst.msk [vmem:[#allocation2 + $0xf0] sm:$0xff] %vm213, %v211
        %245 = vst.msk [vmem:[#allocation2 + $0xf8] sm:$0xff] %vm213, %v212
        %v246 = vld [vmem:[%s179 + $0x1] sm:$0xff]
        %v247 = vld [vmem:[%s179 + $0x9] sm:$0xff]
        %v248 = vld [vmem:[%s179 + $0x19] sm:$0xff]
        %v249 = vld [vmem:[%s179 + $0x21] sm:$0xff]
        %v250 = vld [vmem:[%s179 + $0x31] sm:$0xff]
        %v251 = vld [vmem:[%s179 + $0x39] sm:$0xff]
        %v252 = vld [vmem:[%s179 + $0x49] sm:$0xff]
        %v253 = vld [vmem:[%s179 + $0x51] sm:$0xff]
        %v254 = vld [vmem:[%s179 + $0x61] sm:$0xff]
        %v255 = vld [vmem:[%s179 + $0x69] sm:$0xff]
        %v256 = vld [vmem:[%s179 + $0x79] sm:$0xff]
        %v257 = vld [vmem:[%s179 + $0x81] sm:$0xff]
        %v258 = vld [vmem:[%s179 + $0x91] sm:$0xff]
        %v259 = vld [vmem:[%s179 + $0x99] sm:$0xff]
        %v260 = vld [vmem:[%s179 + $0xa9] sm:$0xff]
        %v261 = vld [vmem:[%s179 + $0xb1] sm:$0xff]
        %v262 = vld [vmem:[%s179 + $0xc1] sm:$0xff]
        %v263 = vld [vmem:[%s179 + $0xc9] sm:$0xff]
        %v264 = vld [vmem:[%s179 + $0xd9] sm:$0xff]
        %v265 = vld [vmem:[%s179 + $0xe1] sm:$0xff]
        %v266 = vld [vmem:[%s179 + $0xf1] sm:$0xff]
        %v267 = vld [vmem:[%s179 + $0xf9] sm:$0xff]
        %v268 = vld [vmem:[%s179 + $0x109] sm:$0xff]
        %v269 = vld [vmem:[%s179 + $0x111] sm:$0xff]
        %v270 = vld [vmem:[%s179 + $0x121] sm:$0xff]
        %v271 = vld [vmem:[%s179 + $0x129] sm:$0xff]
        %v272 = vld [vmem:[%s179 + $0x139] sm:$0xff]
        %v273 = vld [vmem:[%s179 + $0x141] sm:$0xff]
        %v274 = vld [vmem:[%s179 + $0x151] sm:$0xff]
        %v275 = vld [vmem:[%s179 + $0x159] sm:$0xff]
        %v276 = vld [vmem:[%s179 + $0x169] sm:$0xff]
        %v277 = vld [vmem:[%s179 + $0x171] sm:$0xff]
        %310 = vrot.lane.b32.xlu0 %v246, 4
        %v311 = vpop.permute.xlu0 %310
        %312 = vrot.lane.b32.xlu0 %v247, 4
        %v313 = vpop.permute.xlu0 %312
        %314 = vrot.lane.b32.xlu0 %v248, 4
        %v315 = vpop.permute.xlu0 %314
        %316 = vrot.lane.b32.xlu0 %v249, 4
        %v317 = vpop.permute.xlu0 %316
        %318 = vrot.lane.b32.xlu0 %v250, 4
        %v319 = vpop.permute.xlu0 %318
        %320 = vrot.lane.b32.xlu0 %v251, 4
        %v321 = vpop.permute.xlu0 %320
        %322 = vrot.lane.b32.xlu0 %v252, 4
        %v323 = vpop.permute.xlu0 %322
        %324 = vrot.lane.b32.xlu0 %v253, 4
        %v325 = vpop.permute.xlu0 %324
        %326 = vrot.lane.b32.xlu0 %v254, 4
        %v327 = vpop.permute.xlu0 %326
        %328 = vrot.lane.b32.xlu0 %v255, 4
        %v329 = vpop.permute.xlu0 %328
        %330 = vrot.lane.b32.xlu0 %v256, 4
        %v331 = vpop.permute.xlu0 %330
        %332 = vrot.lane.b32.xlu0 %v257, 4
        %v333 = vpop.permute.xlu0 %332
        %334 = vrot.lane.b32.xlu0 %v258, 4
        %v335 = vpop.permute.xlu0 %334
        %336 = vrot.lane.b32.xlu0 %v259, 4
        %v337 = vpop.permute.xlu0 %336
        %338 = vrot.lane.b32.xlu0 %v260, 4
        %v339 = vpop.permute.xlu0 %338
        %340 = vrot.lane.b32.xlu0 %v261, 4
        %v341 = vpop.permute.xlu0 %340
        %342 = vrot.lane.b32.xlu0 %v262, 4
        %v343 = vpop.permute.xlu0 %342
        %344 = vrot.lane.b32.xlu0 %v263, 4
        %v345 = vpop.permute.xlu0 %344
        %346 = vrot.lane.b32.xlu0 %v264, 4
        %v347 = vpop.permute.xlu0 %346
        %348 = vrot.lane.b32.xlu0 %v265, 4
        %v349 = vpop.permute.xlu0 %348
        %350 = vrot.lane.b32.xlu0 %v266, 4
        %v351 = vpop.permute.xlu0 %350
        %352 = vrot.lane.b32.xlu0 %v267, 4
        %v353 = vpop.permute.xlu0 %352
        %354 = vrot.lane.b32.xlu0 %v268, 4
        %v355 = vpop.permute.xlu0 %354
        %356 = vrot.lane.b32.xlu0 %v269, 4
        %v357 = vpop.permute.xlu0 %356
        %358 = vrot.lane.b32.xlu0 %v270, 4
        %v359 = vpop.permute.xlu0 %358
        %360 = vrot.lane.b32.xlu0 %v271, 4
        %v361 = vpop.permute.xlu0 %360
        %362 = vrot.lane.b32.xlu0 %v272, 4
        %v363 = vpop.permute.xlu0 %362
        %364 = vrot.lane.b32.xlu0 %v273, 4
        %v365 = vpop.permute.xlu0 %364
        %366 = vrot.lane.b32.xlu0 %v274, 4
        %v367 = vpop.permute.xlu0 %366
        %368 = vrot.lane.b32.xlu0 %v275, 4
        %v369 = vpop.permute.xlu0 %368
        %370 = vrot.lane.b32.xlu0 %v276, 4
        %v371 = vpop.permute.xlu0 %370
        %372 = vrot.lane.b32.xlu0 %v277, 4
        %v373 = vpop.permute.xlu0 %372
        %vm406 = vcmask 64544
        %407 = vst.msk [vmem:[#allocation2] sm:$0xff] %vm406, %v311
        %408 = vst.msk [vmem:[#allocation2 + $0x8] sm:$0xff] %vm406, %v313
        %409 = vst.msk [vmem:[#allocation2 + $0x10] sm:$0xff] %vm406, %v315
        %410 = vst.msk [vmem:[#allocation2 + $0x18] sm:$0xff] %vm406, %v317
        %411 = vst.msk [vmem:[#allocation2 + $0x20] sm:$0xff] %vm406, %v319
        %412 = vst.msk [vmem:[#allocation2 + $0x28] sm:$0xff] %vm406, %v321
        %413 = vst.msk [vmem:[#allocation2 + $0x30] sm:$0xff] %vm406, %v323
        %414 = vst.msk [vmem:[#allocation2 + $0x38] sm:$0xff] %vm406, %v325
        %415 = vst.msk [vmem:[#allocation2 + $0x40] sm:$0xff] %vm406, %v327
        %416 = vst.msk [vmem:[#allocation2 + $0x48] sm:$0xff] %vm406, %v329
        %417 = vst.msk [vmem:[#allocation2 + $0x50] sm:$0xff] %vm406, %v331
        %418 = vst.msk [vmem:[#allocation2 + $0x58] sm:$0xff] %vm406, %v333
        %419 = vst.msk [vmem:[#allocation2 + $0x60] sm:$0xff] %vm406, %v335
        %420 = vst.msk [vmem:[#allocation2 + $0x68] sm:$0xff] %vm406, %v337
        %421 = vst.msk [vmem:[#allocation2 + $0x70] sm:$0xff] %vm406, %v339
        %422 = vst.msk [vmem:[#allocation2 + $0x78] sm:$0xff] %vm406, %v341
        %423 = vst.msk [vmem:[#allocation2 + $0x80] sm:$0xff] %vm406, %v343
        %424 = vst.msk [vmem:[#allocation2 + $0x88] sm:$0xff] %vm406, %v345
        %425 = vst.msk [vmem:[#allocation2 + $0x90] sm:$0xff] %vm406, %v347
        %426 = vst.msk [vmem:[#allocation2 + $0x98] sm:$0xff] %vm406, %v349
        %427 = vst.msk [vmem:[#allocation2 + $0xa0] sm:$0xff] %vm406, %v351
        %428 = vst.msk [vmem:[#allocation2 + $0xa8] sm:$0xff] %vm406, %v353
        %429 = vst.msk [vmem:[#allocation2 + $0xb0] sm:$0xff] %vm406, %v355
        %430 = vst.msk [vmem:[#allocation2 + $0xb8] sm:$0xff] %vm406, %v357
        %431 = vst.msk [vmem:[#allocation2 + $0xc0] sm:$0xff] %vm406, %v359
        %432 = vst.msk [vmem:[#allocation2 + $0xc8] sm:$0xff] %vm406, %v361
        %433 = vst.msk [vmem:[#allocation2 + $0xd0] sm:$0xff] %vm406, %v363
        %434 = vst.msk [vmem:[#allocation2 + $0xd8] sm:$0xff] %vm406, %v365
        %435 = vst.msk [vmem:[#allocation2 + $0xe0] sm:$0xff] %vm406, %v367
        %436 = vst.msk [vmem:[#allocation2 + $0xe8] sm:$0xff] %vm406, %v369
        %437 = vst.msk [vmem:[#allocation2 + $0xf0] sm:$0xff] %vm406, %v371
        %438 = vst.msk [vmem:[#allocation2 + $0xf8] sm:$0xff] %vm406, %v373
        %v439 = vld [vmem:[%s179 + $0x2] sm:$0xff]
        %v440 = vld [vmem:[%s179 + $0xa] sm:$0xff]
        %v441 = vld [vmem:[%s179 + $0x1a] sm:$0xff]
        %v442 = vld [vmem:[%s179 + $0x22] sm:$0xff]
        %v443 = vld [vmem:[%s179 + $0x32] sm:$0xff]
        %v444 = vld [vmem:[%s179 + $0x3a] sm:$0xff]
        %v445 = vld [vmem:[%s179 + $0x4a] sm:$0xff]
        %v446 = vld [vmem:[%s179 + $0x52] sm:$0xff]
        %v447 = vld [vmem:[%s179 + $0x62] sm:$0xff]
        %v448 = vld [vmem:[%s179 + $0x6a] sm:$0xff]
        %v449 = vld [vmem:[%s179 + $0x7a] sm:$0xff]
        %v450 = vld [vmem:[%s179 + $0x82] sm:$0xff]
        %v451 = vld [vmem:[%s179 + $0x92] sm:$0xff]
        %v452 = vld [vmem:[%s179 + $0x9a] sm:$0xff]
        %v453 = vld [vmem:[%s179 + $0xaa] sm:$0xff]
        %v454 = vld [vmem:[%s179 + $0xb2] sm:$0xff]
        %v455 = vld [vmem:[%s179 + $0xc2] sm:$0xff]
        %v456 = vld [vmem:[%s179 + $0xca] sm:$0xff]
        %v457 = vld [vmem:[%s179 + $0xda] sm:$0xff]
        %v458 = vld [vmem:[%s179 + $0xe2] sm:$0xff]
        %v459 = vld [vmem:[%s179 + $0xf2] sm:$0xff]
        %v460 = vld [vmem:[%s179 + $0xfa] sm:$0xff]
        %v461 = vld [vmem:[%s179 + $0x10a] sm:$0xff]
        %v462 = vld [vmem:[%s179 + $0x112] sm:$0xff]
        %v463 = vld [vmem:[%s179 + $0x122] sm:$0xff]
        %v464 = vld [vmem:[%s179 + $0x12a] sm:$0xff]
        %v465 = vld [vmem:[%s179 + $0x13a] sm:$0xff]
        %v466 = vld [vmem:[%s179 + $0x142] sm:$0xff]
        %v467 = vld [vmem:[%s179 + $0x152] sm:$0xff]
        %v468 = vld [vmem:[%s179 + $0x15a] sm:$0xff]
        %v469 = vld [vmem:[%s179 + $0x16a] sm:$0xff]
        %v470 = vld [vmem:[%s179 + $0x172] sm:$0xff]
        %503 = vrot.lane.b32.xlu0 %v439, 8
        %v504 = vpop.permute.xlu0 %503
        %505 = vrot.lane.b32.xlu0 %v440, 8
        %v506 = vpop.permute.xlu0 %505
        %507 = vrot.lane.b32.xlu0 %v441, 8
        %v508 = vpop.permute.xlu0 %507
        %509 = vrot.lane.b32.xlu0 %v442, 8
        %v510 = vpop.permute.xlu0 %509
        %511 = vrot.lane.b32.xlu0 %v443, 8
        %v512 = vpop.permute.xlu0 %511
        %513 = vrot.lane.b32.xlu0 %v444, 8
        %v514 = vpop.permute.xlu0 %513
        %515 = vrot.lane.b32.xlu0 %v445, 8
        %v516 = vpop.permute.xlu0 %515
        %517 = vrot.lane.b32.xlu0 %v446, 8
        %v518 = vpop.permute.xlu0 %517
        %519 = vrot.lane.b32.xlu0 %v447, 8
        %v520 = vpop.permute.xlu0 %519
        %521 = vrot.lane.b32.xlu0 %v448, 8
        %v522 = vpop.permute.xlu0 %521
        %523 = vrot.lane.b32.xlu0 %v449, 8
        %v524 = vpop.permute.xlu0 %523
        %525 = vrot.lane.b32.xlu0 %v450, 8
        %v526 = vpop.permute.xlu0 %525
        %527 = vrot.lane.b32.xlu0 %v451, 8
        %v528 = vpop.permute.xlu0 %527
        %529 = vrot.lane.b32.xlu0 %v452, 8
        %v530 = vpop.permute.xlu0 %529
        %531 = vrot.lane.b32.xlu0 %v453, 8
        %v532 = vpop.permute.xlu0 %531
        %533 = vrot.lane.b32.xlu0 %v454, 8
        %v534 = vpop.permute.xlu0 %533
        %535 = vrot.lane.b32.xlu0 %v455, 8
        %v536 = vpop.permute.xlu0 %535
        %537 = vrot.lane.b32.xlu0 %v456, 8
        %v538 = vpop.permute.xlu0 %537
        %539 = vrot.lane.b32.xlu0 %v457, 8
        %v540 = vpop.permute.xlu0 %539
        %541 = vrot.lane.b32.xlu0 %v458, 8
        %v542 = vpop.permute.xlu0 %541
        %543 = vrot.lane.b32.xlu0 %v459, 8
        %v544 = vpop.permute.xlu0 %543
        %545 = vrot.lane.b32.xlu0 %v460, 8
        %v546 = vpop.permute.xlu0 %545
        %547 = vrot.lane.b32.xlu0 %v461, 8
        %v548 = vpop.permute.xlu0 %547
        %549 = vrot.lane.b32.xlu0 %v462, 8
        %v550 = vpop.permute.xlu0 %549
        %551 = vrot.lane.b32.xlu0 %v463, 8
        %v552 = vpop.permute.xlu0 %551
        %553 = vrot.lane.b32.xlu0 %v464, 8
        %v554 = vpop.permute.xlu0 %553
        %555 = vrot.lane.b32.xlu0 %v465, 8
        %v556 = vpop.permute.xlu0 %555
        %557 = vrot.lane.b32.xlu0 %v466, 8
        %v558 = vpop.permute.xlu0 %557
        %559 = vrot.lane.b32.xlu0 %v467, 8
        %v560 = vpop.permute.xlu0 %559
        %561 = vrot.lane.b32.xlu0 %v468, 8
        %v562 = vpop.permute.xlu0 %561
        %563 = vrot.lane.b32.xlu0 %v469, 8
        %v564 = vpop.permute.xlu0 %563
        %565 = vrot.lane.b32.xlu0 %v470, 8
        %v566 = vpop.permute.xlu0 %565
        %vm599 = vcmask 97344
        %600 = vst.msk [vmem:[#allocation2] sm:$0xff] %vm599, %v504
        %601 = vst.msk [vmem:[#allocation2 + $0x8] sm:$0xff] %vm599, %v506
        %602 = vst.msk [vmem:[#allocation2 + $0x10] sm:$0xff] %vm599, %v508
        %603 = vst.msk [vmem:[#allocation2 + $0x18] sm:$0xff] %vm599, %v510
        %604 = vst.msk [vmem:[#allocation2 + $0x20] sm:$0xff] %vm599, %v512
        %605 = vst.msk [vmem:[#allocation2 + $0x28] sm:$0xff] %vm599, %v514
        %606 = vst.msk [vmem:[#allocation2 + $0x30] sm:$0xff] %vm599, %v516
        %607 = vst.msk [vmem:[#allocation2 + $0x38] sm:$0xff] %vm599, %v518
        %608 = vst.msk [vmem:[#allocation2 + $0x40] sm:$0xff] %vm599, %v520
        %609 = vst.msk [vmem:[#allocation2 + $0x48] sm:$0xff] %vm599, %v522
        %610 = vst.msk [vmem:[#allocation2 + $0x50] sm:$0xff] %vm599, %v524
        %611 = vst.msk [vmem:[#allocation2 + $0x58] sm:$0xff] %vm599, %v526
        %612 = vst.msk [vmem:[#allocation2 + $0x60] sm:$0xff] %vm599, %v528
        %613 = vst.msk [vmem:[#allocation2 + $0x68] sm:$0xff] %vm599, %v530
        %614 = vst.msk [vmem:[#allocation2 + $0x70] sm:$0xff] %vm599, %v532
        %615 = vst.msk [vmem:[#allocation2 + $0x78] sm:$0xff] %vm599, %v534
        %616 = vst.msk [vmem:[#allocation2 + $0x80] sm:$0xff] %vm599, %v536
        %617 = vst.msk [vmem:[#allocation2 + $0x88] sm:$0xff] %vm599, %v538
        %618 = vst.msk [vmem:[#allocation2 + $0x90] sm:$0xff] %vm599, %v540
        %619 = vst.msk [vmem:[#allocation2 + $0x98] sm:$0xff] %vm599, %v542
        %620 = vst.msk [vmem:[#allocation2 + $0xa0] sm:$0xff] %vm599, %v544
        %621 = vst.msk [vmem:[#allocation2 + $0xa8] sm:$0xff] %vm599, %v546
        %622 = vst.msk [vmem:[#allocation2 + $0xb0] sm:$0xff] %vm599, %v548
        %623 = vst.msk [vmem:[#allocation2 + $0xb8] sm:$0xff] %vm599, %v550
        %624 = vst.msk [vmem:[#allocation2 + $0xc0] sm:$0xff] %vm599, %v552
        %625 = vst.msk [vmem:[#allocation2 + $0xc8] sm:$0xff] %vm599, %v554
        %626 = vst.msk [vmem:[#allocation2 + $0xd0] sm:$0xff] %vm599, %v556
        %627 = vst.msk [vmem:[#allocation2 + $0xd8] sm:$0xff] %vm599, %v558
        %628 = vst.msk [vmem:[#allocation2 + $0xe0] sm:$0xff] %vm599, %v560
        %629 = vst.msk [vmem:[#allocation2 + $0xe8] sm:$0xff] %vm599, %v562
        %630 = vst.msk [vmem:[#allocation2 + $0xf0] sm:$0xff] %vm599, %v564
        %631 = vst.msk [vmem:[#allocation2 + $0xf8] sm:$0xff] %vm599, %v566
        %s632 = scalar_lea.vmem %s179, 24
        %v633 = vld [vmem:[%s632] sm:$0xff]
        %v634 = vld [vmem:[%s632 + $0x8] sm:$0xff]
        %v635 = vld [vmem:[%s632 + $0x18] sm:$0xff]
        %v636 = vld [vmem:[%s632 + $0x20] sm:$0xff]
        %v637 = vld [vmem:[%s632 + $0x30] sm:$0xff]
        %v638 = vld [vmem:[%s632 + $0x38] sm:$0xff]
        %v639 = vld [vmem:[%s632 + $0x48] sm:$0xff]
        %v640 = vld [vmem:[%s632 + $0x50] sm:$0xff]
        %v641 = vld [vmem:[%s632 + $0x60] sm:$0xff]
        %v642 = vld [vmem:[%s632 + $0x68] sm:$0xff]
        %v643 = vld [vmem:[%s632 + $0x78] sm:$0xff]
        %v644 = vld [vmem:[%s632 + $0x80] sm:$0xff]
        %v645 = vld [vmem:[%s632 + $0x90] sm:$0xff]
        %v646 = vld [vmem:[%s632 + $0x98] sm:$0xff]
        %v647 = vld [vmem:[%s632 + $0xa8] sm:$0xff]
        %v648 = vld [vmem:[%s632 + $0xb0] sm:$0xff]
        %v649 = vld [vmem:[%s632 + $0xc0] sm:$0xff]
        %v650 = vld [vmem:[%s632 + $0xc8] sm:$0xff]
        %v651 = vld [vmem:[%s632 + $0xd8] sm:$0xff]
        %v652 = vld [vmem:[%s632 + $0xe0] sm:$0xff]
        %v653 = vld [vmem:[%s632 + $0xf0] sm:$0xff]
        %v654 = vld [vmem:[%s632 + $0xf8] sm:$0xff]
        %v655 = vld [vmem:[%s632 + $0x108] sm:$0xff]
        %v656 = vld [vmem:[%s632 + $0x110] sm:$0xff]
        %v657 = vld [vmem:[%s632 + $0x120] sm:$0xff]
        %v658 = vld [vmem:[%s632 + $0x128] sm:$0xff]
        %v659 = vld [vmem:[%s632 + $0x138] sm:$0xff]
        %v660 = vld [vmem:[%s632 + $0x140] sm:$0xff]
        %v661 = vld [vmem:[%s632 + $0x150] sm:$0xff]
        %v662 = vld [vmem:[%s632 + $0x158] sm:$0xff]
        %v663 = vld [vmem:[%s632 + $0x168] sm:$0xff]
        %v664 = vld [vmem:[%s632 + $0x170] sm:$0xff]
        %697 = vrot.lane.b32.xlu0 %v633, 12
        %v698 = vpop.permute.xlu0 %697
        %699 = vrot.lane.b32.xlu0 %v634, 12
        %v700 = vpop.permute.xlu0 %699
        %701 = vrot.lane.b32.xlu0 %v635, 12
        %v702 = vpop.permute.xlu0 %701
        %703 = vrot.lane.b32.xlu0 %v636, 12
        %v704 = vpop.permute.xlu0 %703
        %705 = vrot.lane.b32.xlu0 %v637, 12
        %v706 = vpop.permute.xlu0 %705
        %707 = vrot.lane.b32.xlu0 %v638, 12
        %v708 = vpop.permute.xlu0 %707
        %709 = vrot.lane.b32.xlu0 %v639, 12
        %v710 = vpop.permute.xlu0 %709
        %711 = vrot.lane.b32.xlu0 %v640, 12
        %v712 = vpop.permute.xlu0 %711
        %713 = vrot.lane.b32.xlu0 %v641, 12
        %v714 = vpop.permute.xlu0 %713
        %715 = vrot.lane.b32.xlu0 %v642, 12
        %v716 = vpop.permute.xlu0 %715
        %717 = vrot.lane.b32.xlu0 %v643, 12
        %v718 = vpop.permute.xlu0 %717
        %719 = vrot.lane.b32.xlu0 %v644, 12
        %v720 = vpop.permute.xlu0 %719
        %721 = vrot.lane.b32.xlu0 %v645, 12
        %v722 = vpop.permute.xlu0 %721
        %723 = vrot.lane.b32.xlu0 %v646, 12
        %v724 = vpop.permute.xlu0 %723
        %725 = vrot.lane.b32.xlu0 %v647, 12
        %v726 = vpop.permute.xlu0 %725
        %727 = vrot.lane.b32.xlu0 %v648, 12
        %v728 = vpop.permute.xlu0 %727
        %729 = vrot.lane.b32.xlu0 %v649, 12
        %v730 = vpop.permute.xlu0 %729
        %731 = vrot.lane.b32.xlu0 %v650, 12
        %v732 = vpop.permute.xlu0 %731
        %733 = vrot.lane.b32.xlu0 %v651, 12
        %v734 = vpop.permute.xlu0 %733
        %735 = vrot.lane.b32.xlu0 %v652, 12
        %v736 = vpop.permute.xlu0 %735
        %737 = vrot.lane.b32.xlu0 %v653, 12
        %v738 = vpop.permute.xlu0 %737
        %739 = vrot.lane.b32.xlu0 %v654, 12
        %v740 = vpop.permute.xlu0 %739
        %741 = vrot.lane.b32.xlu0 %v655, 12
        %v742 = vpop.permute.xlu0 %741
        %743 = vrot.lane.b32.xlu0 %v656, 12
        %v744 = vpop.permute.xlu0 %743
        %745 = vrot.lane.b32.xlu0 %v657, 12
        %v746 = vpop.permute.xlu0 %745
        %747 = vrot.lane.b32.xlu0 %v658, 12
        %v748 = vpop.permute.xlu0 %747
        %749 = vrot.lane.b32.xlu0 %v659, 12
        %v750 = vpop.permute.xlu0 %749
        %751 = vrot.lane.b32.xlu0 %v660, 12
        %v752 = vpop.permute.xlu0 %751
        %753 = vrot.lane.b32.xlu0 %v661, 12
        %v754 = vpop.permute.xlu0 %753
        %755 = vrot.lane.b32.xlu0 %v662, 12
        %v756 = vpop.permute.xlu0 %755
        %757 = vrot.lane.b32.xlu0 %v663, 12
        %v758 = vpop.permute.xlu0 %757
        %759 = vrot.lane.b32.xlu0 %v664, 12
        %v760 = vpop.permute.xlu0 %759
        %vm793 = vcmask 130144
        %794 = vst.msk [vmem:[#allocation2] sm:$0xff] %vm793, %v698
        %795 = vst.msk [vmem:[#allocation2 + $0x8] sm:$0xff] %vm793, %v700
        %796 = vst.msk [vmem:[#allocation2 + $0x10] sm:$0xff] %vm793, %v702
        %797 = vst.msk [vmem:[#allocation2 + $0x18] sm:$0xff] %vm793, %v704
        %798 = vst.msk [vmem:[#allocation2 + $0x20] sm:$0xff] %vm793, %v706
        %799 = vst.msk [vmem:[#allocation2 + $0x28] sm:$0xff] %vm793, %v708
        %800 = vst.msk [vmem:[#allocation2 + $0x30] sm:$0xff] %vm793, %v710
        %801 = vst.msk [vmem:[#allocation2 + $0x38] sm:$0xff] %vm793, %v712
        %802 = vst.msk [vmem:[#allocation2 + $0x40] sm:$0xff] %vm793, %v714
        %803 = vst.msk [vmem:[#allocation2 + $0x48] sm:$0xff] %vm793, %v716
        %804 = vst.msk [vmem:[#allocation2 + $0x50] sm:$0xff] %vm793, %v718
        %805 = vst.msk [vmem:[#allocation2 + $0x58] sm:$0xff] %vm793, %v720
        %806 = vst.msk [vmem:[#allocation2 + $0x60] sm:$0xff] %vm793, %v722
        %807 = vst.msk [vmem:[#allocation2 + $0x68] sm:$0xff] %vm793, %v724
        %808 = vst.msk [vmem:[#allocation2 + $0x70] sm:$0xff] %vm793, %v726
        %809 = vst.msk [vmem:[#allocation2 + $0x78] sm:$0xff] %vm793, %v728
        %810 = vst.msk [vmem:[#allocation2 + $0x80] sm:$0xff] %vm793, %v730
        %811 = vst.msk [vmem:[#allocation2 + $0x88] sm:$0xff] %vm793, %v732
        %812 = vst.msk [vmem:[#allocation2 + $0x90] sm:$0xff] %vm793, %v734
        %813 = vst.msk [vmem:[#allocation2 + $0x98] sm:$0xff] %vm793, %v736
        %814 = vst.msk [vmem:[#allocation2 + $0xa0] sm:$0xff] %vm793, %v738
        %815 = vst.msk [vmem:[#allocation2 + $0xa8] sm:$0xff] %vm793, %v740
        %816 = vst.msk [vmem:[#allocation2 + $0xb0] sm:$0xff] %vm793, %v742
        %817 = vst.msk [vmem:[#allocation2 + $0xb8] sm:$0xff] %vm793, %v744
        %818 = vst.msk [vmem:[#allocation2 + $0xc0] sm:$0xff] %vm793, %v746
        %819 = vst.msk [vmem:[#allocation2 + $0xc8] sm:$0xff] %vm793, %v748
        %820 = vst.msk [vmem:[#allocation2 + $0xd0] sm:$0xff] %vm793, %v750
        %821 = vst.msk [vmem:[#allocation2 + $0xd8] sm:$0xff] %vm793, %v752
        %822 = vst.msk [vmem:[#allocation2 + $0xe0] sm:$0xff] %vm793, %v754
        %823 = vst.msk [vmem:[#allocation2 + $0xe8] sm:$0xff] %vm793, %v756
        %824 = vst.msk [vmem:[#allocation2 + $0xf0] sm:$0xff] %vm793, %v758
        %825 = vst.msk [vmem:[#allocation2 + $0xf8] sm:$0xff] %vm793, %v760
        %v826 = vld [vmem:[%s632 + $0x1] sm:$0xff]
        %v827 = vld [vmem:[%s632 + $0x9] sm:$0xff]
        %v828 = vld [vmem:[%s632 + $0x19] sm:$0xff]
        %v829 = vld [vmem:[%s632 + $0x21] sm:$0xff]
        %v830 = vld [vmem:[%s632 + $0x31] sm:$0xff]
        %v831 = vld [vmem:[%s632 + $0x39] sm:$0xff]
        %v832 = vld [vmem:[%s632 + $0x49] sm:$0xff]
        %v833 = vld [vmem:[%s632 + $0x51] sm:$0xff]
        %v834 = vld [vmem:[%s632 + $0x61] sm:$0xff]
        %v835 = vld [vmem:[%s632 + $0x69] sm:$0xff]
        %v836 = vld [vmem:[%s632 + $0x79] sm:$0xff]
        %v837 = vld [vmem:[%s632 + $0x81] sm:$0xff]
        %v838 = vld [vmem:[%s632 + $0x91] sm:$0xff]
        %v839 = vld [vmem:[%s632 + $0x99] sm:$0xff]
        %v840 = vld [vmem:[%s632 + $0xa9] sm:$0xff]
        %v841 = vld [vmem:[%s632 + $0xb1] sm:$0xff]
        %v842 = vld [vmem:[%s632 + $0xc1] sm:$0xff]
        %v843 = vld [vmem:[%s632 + $0xc9] sm:$0xff]
        %v844 = vld [vmem:[%s632 + $0xd9] sm:$0xff]
        %v845 = vld [vmem:[%s632 + $0xe1] sm:$0xff]
        %v846 = vld [vmem:[%s632 + $0xf1] sm:$0xff]
        %v847 = vld [vmem:[%s632 + $0xf9] sm:$0xff]
        %v848 = vld [vmem:[%s632 + $0x109] sm:$0xff]
        %v849 = vld [vmem:[%s632 + $0x111] sm:$0xff]
        %v850 = vld [vmem:[%s632 + $0x121] sm:$0xff]
        %v851 = vld [vmem:[%s632 + $0x129] sm:$0xff]
        %v852 = vld [vmem:[%s632 + $0x139] sm:$0xff]
        %v853 = vld [vmem:[%s632 + $0x141] sm:$0xff]
        %v854 = vld [vmem:[%s632 + $0x151] sm:$0xff]
        %v855 = vld [vmem:[%s632 + $0x159] sm:$0xff]
        %v856 = vld [vmem:[%s632 + $0x169] sm:$0xff]
        %v857 = vld [vmem:[%s632 + $0x171] sm:$0xff]
        %890 = vrot.lane.b32.xlu0 %v826, 16
        %v891 = vpop.permute.xlu0 %890
        %892 = vrot.lane.b32.xlu0 %v827, 16
        %v893 = vpop.permute.xlu0 %892
        %894 = vrot.lane.b32.xlu0 %v828, 16
        %v895 = vpop.permute.xlu0 %894
        %896 = vrot.lane.b32.xlu0 %v829, 16
        %v897 = vpop.permute.xlu0 %896
        %898 = vrot.lane.b32.xlu0 %v830, 16
        %v899 = vpop.permute.xlu0 %898
        %900 = vrot.lane.b32.xlu0 %v831, 16
        %v901 = vpop.permute.xlu0 %900
        %902 = vrot.lane.b32.xlu0 %v832, 16
        %v903 = vpop.permute.xlu0 %902
        %904 = vrot.lane.b32.xlu0 %v833, 16
        %v905 = vpop.permute.xlu0 %904
        %906 = vrot.lane.b32.xlu0 %v834, 16
        %v907 = vpop.permute.xlu0 %906
        %908 = vrot.lane.b32.xlu0 %v835, 16
        %v909 = vpop.permute.xlu0 %908
        %910 = vrot.lane.b32.xlu0 %v836, 16
        %v911 = vpop.permute.xlu0 %910
        %912 = vrot.lane.b32.xlu0 %v837, 16
        %v913 = vpop.permute.xlu0 %912
        %914 = vrot.lane.b32.xlu0 %v838, 16
        %v915 = vpop.permute.xlu0 %914
        %916 = vrot.lane.b32.xlu0 %v839, 16
        %v917 = vpop.permute.xlu0 %916
        %918 = vrot.lane.b32.xlu0 %v840, 16
        %v919 = vpop.permute.xlu0 %918
        %920 = vrot.lane.b32.xlu0 %v841, 16
        %v921 = vpop.permute.xlu0 %920
        %922 = vrot.lane.b32.xlu0 %v842, 16
        %v923 = vpop.permute.xlu0 %922
        %924 = vrot.lane.b32.xlu0 %v843, 16
        %v925 = vpop.permute.xlu0 %924
        %926 = vrot.lane.b32.xlu0 %v844, 16
        %v927 = vpop.permute.xlu0 %926
        %928 = vrot.lane.b32.xlu0 %v845, 16
        %v929 = vpop.permute.xlu0 %928
        %930 = vrot.lane.b32.xlu0 %v846, 16
        %v931 = vpop.permute.xlu0 %930
        %932 = vrot.lane.b32.xlu0 %v847, 16
        %v933 = vpop.permute.xlu0 %932
        %934 = vrot.lane.b32.xlu0 %v848, 16
        %v935 = vpop.permute.xlu0 %934
        %936 = vrot.lane.b32.xlu0 %v849, 16
        %v937 = vpop.permute.xlu0 %936
        %938 = vrot.lane.b32.xlu0 %v850, 16
        %v939 = vpop.permute.xlu0 %938
        %940 = vrot.lane.b32.xlu0 %v851, 16
        %v941 = vpop.permute.xlu0 %940
        %942 = vrot.lane.b32.xlu0 %v852, 16
        %v943 = vpop.permute.xlu0 %942
        %944 = vrot.lane.b32.xlu0 %v853, 16
        %v945 = vpop.permute.xlu0 %944
        %946 = vrot.lane.b32.xlu0 %v854, 16
        %v947 = vpop.permute.xlu0 %946
        %948 = vrot.lane.b32.xlu0 %v855, 16
        %v949 = vpop.permute.xlu0 %948
        %950 = vrot.lane.b32.xlu0 %v856, 16
        %v951 = vpop.permute.xlu0 %950
        %952 = vrot.lane.b32.xlu0 %v857, 16
        %v953 = vpop.permute.xlu0 %952
        %vm986 = vcmask 162944
        %987 = vst.msk [vmem:[#allocation2] sm:$0xff] %vm986, %v891
        %988 = vst.msk [vmem:[#allocation2 + $0x8] sm:$0xff] %vm986, %v893
        %989 = vst.msk [vmem:[#allocation2 + $0x10] sm:$0xff] %vm986, %v895
        %990 = vst.msk [vmem:[#allocation2 + $0x18] sm:$0xff] %vm986, %v897
        %991 = vst.msk [vmem:[#allocation2 + $0x20] sm:$0xff] %vm986, %v899
        %992 = vst.msk [vmem:[#allocation2 + $0x28] sm:$0xff] %vm986, %v901
        %993 = vst.msk [vmem:[#allocation2 + $0x30] sm:$0xff] %vm986, %v903
        %994 = vst.msk [vmem:[#allocation2 + $0x38] sm:$0xff] %vm986, %v905
        %995 = vst.msk [vmem:[#allocation2 + $0x40] sm:$0xff] %vm986, %v907
        %996 = vst.msk [vmem:[#allocation2 + $0x48] sm:$0xff] %vm986, %v909
        %997 = vst.msk [vmem:[#allocation2 + $0x50] sm:$0xff] %vm986, %v911
        %998 = vst.msk [vmem:[#allocation2 + $0x58] sm:$0xff] %vm986, %v913
        %999 = vst.msk [vmem:[#allocation2 + $0x60] sm:$0xff] %vm986, %v915
        %1000 = vst.msk [vmem:[#allocation2 + $0x68] sm:$0xff] %vm986, %v917
        %1001 = vst.msk [vmem:[#allocation2 + $0x70] sm:$0xff] %vm986, %v919
        %1002 = vst.msk [vmem:[#allocation2 + $0x78] sm:$0xff] %vm986, %v921
        %1003 = vst.msk [vmem:[#allocation2 + $0x80] sm:$0xff] %vm986, %v923
        %1004 = vst.msk [vmem:[#allocation2 + $0x88] sm:$0xff] %vm986, %v925
        %1005 = vst.msk [vmem:[#allocation2 + $0x90] sm:$0xff] %vm986, %v927
        %1006 = vst.msk [vmem:[#allocation2 + $0x98] sm:$0xff] %vm986, %v929
        %1007 = vst.msk [vmem:[#allocation2 + $0xa0] sm:$0xff] %vm986, %v931
        %1008 = vst.msk [vmem:[#allocation2 + $0xa8] sm:$0xff] %vm986, %v933
        %1009 = vst.msk [vmem:[#allocation2 + $0xb0] sm:$0xff] %vm986, %v935
        %1010 = vst.msk [vmem:[#allocation2 + $0xb8] sm:$0xff] %vm986, %v937
        %1011 = vst.msk [vmem:[#allocation2 + $0xc0] sm:$0xff] %vm986, %v939
        %1012 = vst.msk [vmem:[#allocation2 + $0xc8] sm:$0xff] %vm986, %v941
        %1013 = vst.msk [vmem:[#allocation2 + $0xd0] sm:$0xff] %vm986, %v943
        %1014 = vst.msk [vmem:[#allocation2 + $0xd8] sm:$0xff] %vm986, %v945
        %1015 = vst.msk [vmem:[#allocation2 + $0xe0] sm:$0xff] %vm986, %v947
        %1016 = vst.msk [vmem:[#allocation2 + $0xe8] sm:$0xff] %vm986, %v949
        %1017 = vst.msk [vmem:[#allocation2 + $0xf0] sm:$0xff] %vm986, %v951
        %1018 = vst.msk [vmem:[#allocation2 + $0xf8] sm:$0xff] %vm986, %v953
        %v1019 = vld [vmem:[%s632 + $0x2] sm:$0xff]
        %v1020 = vld [vmem:[%s632 + $0xa] sm:$0xff]
        %v1021 = vld [vmem:[%s632 + $0x1a] sm:$0xff]
        %v1022 = vld [vmem:[%s632 + $0x22] sm:$0xff]
        %v1023 = vld [vmem:[%s632 + $0x32] sm:$0xff]
        %v1024 = vld [vmem:[%s632 + $0x3a] sm:$0xff]
        %v1025 = vld [vmem:[%s632 + $0x4a] sm:$0xff]
        %v1026 = vld [vmem:[%s632 + $0x52] sm:$0xff]
        %v1027 = vld [vmem:[%s632 + $0x62] sm:$0xff]
        %v1028 = vld [vmem:[%s632 + $0x6a] sm:$0xff]
        %v1029 = vld [vmem:[%s632 + $0x7a] sm:$0xff]
        %v1030 = vld [vmem:[%s632 + $0x82] sm:$0xff]
        %v1031 = vld [vmem:[%s632 + $0x92] sm:$0xff]
        %v1032 = vld [vmem:[%s632 + $0x9a] sm:$0xff]
        %v1033 = vld [vmem:[%s632 + $0xaa] sm:$0xff]
        %v1034 = vld [vmem:[%s632 + $0xb2] sm:$0xff]
        %v1035 = vld [vmem:[%s632 + $0xc2] sm:$0xff]
        %v1036 = vld [vmem:[%s632 + $0xca] sm:$0xff]
        %v1037 = vld [vmem:[%s632 + $0xda] sm:$0xff]
        %v1038 = vld [vmem:[%s632 + $0xe2] sm:$0xff]
        %v1039 = vld [vmem:[%s632 + $0xf2] sm:$0xff]
        %v1040 = vld [vmem:[%s632 + $0xfa] sm:$0xff]
        %v1041 = vld [vmem:[%s632 + $0x10a] sm:$0xff]
        %v1042 = vld [vmem:[%s632 + $0x112] sm:$0xff]
        %v1043 = vld [vmem:[%s632 + $0x122] sm:$0xff]
        %v1044 = vld [vmem:[%s632 + $0x12a] sm:$0xff]
        %v1045 = vld [vmem:[%s632 + $0x13a] sm:$0xff]
        %v1046 = vld [vmem:[%s632 + $0x142] sm:$0xff]
        %v1047 = vld [vmem:[%s632 + $0x152] sm:$0xff]
        %v1048 = vld [vmem:[%s632 + $0x15a] sm:$0xff]
        %v1049 = vld [vmem:[%s632 + $0x16a] sm:$0xff]
        %v1050 = vld [vmem:[%s632 + $0x172] sm:$0xff]
        %1083 = vrot.lane.b32.xlu0 %v1019, 20
        %v1084 = vpop.permute.xlu0 %1083
        %1085 = vrot.lane.b32.xlu0 %v1020, 20
        %v1086 = vpop.permute.xlu0 %1085
        %1087 = vrot.lane.b32.xlu0 %v1021, 20
        %v1088 = vpop.permute.xlu0 %1087
        %1089 = vrot.lane.b32.xlu0 %v1022, 20
        %v1090 = vpop.permute.xlu0 %1089
        %1091 = vrot.lane.b32.xlu0 %v1023, 20
        %v1092 = vpop.permute.xlu0 %1091
        %1093 = vrot.lane.b32.xlu0 %v1024, 20
        %v1094 = vpop.permute.xlu0 %1093
        %1095 = vrot.lane.b32.xlu0 %v1025, 20
        %v1096 = vpop.permute.xlu0 %1095
        %1097 = vrot.lane.b32.xlu0 %v1026, 20
        %v1098 = vpop.permute.xlu0 %1097
        %1099 = vrot.lane.b32.xlu0 %v1027, 20
        %v1100 = vpop.permute.xlu0 %1099
        %1101 = vrot.lane.b32.xlu0 %v1028, 20
        %v1102 = vpop.permute.xlu0 %1101
        %1103 = vrot.lane.b32.xlu0 %v1029, 20
        %v1104 = vpop.permute.xlu0 %1103
        %1105 = vrot.lane.b32.xlu0 %v1030, 20
        %v1106 = vpop.permute.xlu0 %1105
        %1107 = vrot.lane.b32.xlu0 %v1031, 20
        %v1108 = vpop.permute.xlu0 %1107
        %1109 = vrot.lane.b32.xlu0 %v1032, 20
        %v1110 = vpop.permute.xlu0 %1109
        %1111 = vrot.lane.b32.xlu0 %v1033, 20
        %v1112 = vpop.permute.xlu0 %1111
        %1113 = vrot.lane.b32.xlu0 %v1034, 20
        %v1114 = vpop.permute.xlu0 %1113
        %1115 = vrot.lane.b32.xlu0 %v1035, 20
        %v1116 = vpop.permute.xlu0 %1115
        %1117 = vrot.lane.b32.xlu0 %v1036, 20
        %v1118 = vpop.permute.xlu0 %1117
        %1119 = vrot.lane.b32.xlu0 %v1037, 20
        %v1120 = vpop.permute.xlu0 %1119
        %1121 = vrot.lane.b32.xlu0 %v1038, 20
        %v1122 = vpop.permute.xlu0 %1121
        %1123 = vrot.lane.b32.xlu0 %v1039, 20
        %v1124 = vpop.permute.xlu0 %1123
        %1125 = vrot.lane.b32.xlu0 %v1040, 20
        %v1126 = vpop.permute.xlu0 %1125
        %1127 = vrot.lane.b32.xlu0 %v1041, 20
        %v1128 = vpop.permute.xlu0 %1127
        %1129 = vrot.lane.b32.xlu0 %v1042, 20
        %v1130 = vpop.permute.xlu0 %1129
        %1131 = vrot.lane.b32.xlu0 %v1043, 20
        %v1132 = vpop.permute.xlu0 %1131
        %1133 = vrot.lane.b32.xlu0 %v1044, 20
        %v1134 = vpop.permute.xlu0 %1133
        %1135 = vrot.lane.b32.xlu0 %v1045, 20
        %v1136 = vpop.permute.xlu0 %1135
        %1137 = vrot.lane.b32.xlu0 %v1046, 20
        %v1138 = vpop.permute.xlu0 %1137
        %1139 = vrot.lane.b32.xlu0 %v1047, 20
        %v1140 = vpop.permute.xlu0 %1139
        %1141 = vrot.lane.b32.xlu0 %v1048, 20
        %v1142 = vpop.permute.xlu0 %1141
        %1143 = vrot.lane.b32.xlu0 %v1049, 20
        %v1144 = vpop.permute.xlu0 %1143
        %1145 = vrot.lane.b32.xlu0 %v1050, 20
        %v1146 = vpop.permute.xlu0 %1145
        %vm1179 = vcmask 195744
        %1180 = vst.msk [vmem:[#allocation2] sm:$0xff] %vm1179, %v1084
        %1181 = vst.msk [vmem:[#allocation2 + $0x8] sm:$0xff] %vm1179, %v1086
        %1182 = vst.msk [vmem:[#allocation2 + $0x10] sm:$0xff] %vm1179, %v1088
        %1183 = vst.msk [vmem:[#allocation2 + $0x18] sm:$0xff] %vm1179, %v1090
        %1184 = vst.msk [vmem:[#allocation2 + $0x20] sm:$0xff] %vm1179, %v1092
        %1185 = vst.msk [vmem:[#allocation2 + $0x28] sm:$0xff] %vm1179, %v1094
        %1186 = vst.msk [vmem:[#allocation2 + $0x30] sm:$0xff] %vm1179, %v1096
        %1187 = vst.msk [vmem:[#allocation2 + $0x38] sm:$0xff] %vm1179, %v1098
        %1188 = vst.msk [vmem:[#allocation2 + $0x40] sm:$0xff] %vm1179, %v1100
        %1189 = vst.msk [vmem:[#allocation2 + $0x48] sm:$0xff] %vm1179, %v1102
        %1190 = vst.msk [vmem:[#allocation2 + $0x50] sm:$0xff] %vm1179, %v1104
        %1191 = vst.msk [vmem:[#allocation2 + $0x58] sm:$0xff] %vm1179, %v1106
        %1192 = vst.msk [vmem:[#allocation2 + $0x60] sm:$0xff] %vm1179, %v1108
        %1193 = vst.msk [vmem:[#allocation2 + $0x68] sm:$0xff] %vm1179, %v1110
        %1194 = vst.msk [vmem:[#allocation2 + $0x70] sm:$0xff] %vm1179, %v1112
        %1195 = vst.msk [vmem:[#allocation2 + $0x78] sm:$0xff] %vm1179, %v1114
        %1196 = vst.msk [vmem:[#allocation2 + $0x80] sm:$0xff] %vm1179, %v1116
        %1197 = vst.msk [vmem:[#allocation2 + $0x88] sm:$0xff] %vm1179, %v1118
        %1198 = vst.msk [vmem:[#allocation2 + $0x90] sm:$0xff] %vm1179, %v1120
        %1199 = vst.msk [vmem:[#allocation2 + $0x98] sm:$0xff] %vm1179, %v1122
        %1200 = vst.msk [vmem:[#allocation2 + $0xa0] sm:$0xff] %vm1179, %v1124
        %1201 = vst.msk [vmem:[#allocation2 + $0xa8] sm:$0xff] %vm1179, %v1126
        %1202 = vst.msk [vmem:[#allocation2 + $0xb0] sm:$0xff] %vm1179, %v1128
        %1203 = vst.msk [vmem:[#allocation2 + $0xb8] sm:$0xff] %vm1179, %v1130
        %1204 = vst.msk [vmem:[#allocation2 + $0xc0] sm:$0xff] %vm1179, %v1132
        %1205 = vst.msk [vmem:[#allocation2 + $0xc8] sm:$0xff] %vm1179, %v1134
        %1206 = vst.msk [vmem:[#allocation2 + $0xd0] sm:$0xff] %vm1179, %v1136
        %1207 = vst.msk [vmem:[#allocation2 + $0xd8] sm:$0xff] %vm1179, %v1138
        %1208 = vst.msk [vmem:[#allocation2 + $0xe0] sm:$0xff] %vm1179, %v1140
        %1209 = vst.msk [vmem:[#allocation2 + $0xe8] sm:$0xff] %vm1179, %v1142
        %1210 = vst.msk [vmem:[#allocation2 + $0xf0] sm:$0xff] %vm1179, %v1144
        %1211 = vst.msk [vmem:[#allocation2 + $0xf8] sm:$0xff] %vm1179, %v1146
        %s1212 = scalar_lea.vmem %s179, 48
        %v1213 = vld [vmem:[%s1212] sm:$0xff]
        %v1214 = vld [vmem:[%s1212 + $0x8] sm:$0xff]
        %v1215 = vld [vmem:[%s1212 + $0x18] sm:$0xff]
        %v1216 = vld [vmem:[%s1212 + $0x20] sm:$0xff]
        %v1217 = vld [vmem:[%s1212 + $0x30] sm:$0xff]
        %v1218 = vld [vmem:[%s1212 + $0x38] sm:$0xff]
        %v1219 = vld [vmem:[%s1212 + $0x48] sm:$0xff]
        %v1220 = vld [vmem:[%s1212 + $0x50] sm:$0xff]
        %v1221 = vld [vmem:[%s1212 + $0x60] sm:$0xff]
        %v1222 = vld [vmem:[%s1212 + $0x68] sm:$0xff]
        %v1223 = vld [vmem:[%s1212 + $0x78] sm:$0xff]
        %v1224 = vld [vmem:[%s1212 + $0x80] sm:$0xff]
        %v1225 = vld [vmem:[%s1212 + $0x90] sm:$0xff]
        %v1226 = vld [vmem:[%s1212 + $0x98] sm:$0xff]
        %v1227 = vld [vmem:[%s1212 + $0xa8] sm:$0xff]
        %v1228 = vld [vmem:[%s1212 + $0xb0] sm:$0xff]
        %v1229 = vld [vmem:[%s1212 + $0xc0] sm:$0xff]
        %v1230 = vld [vmem:[%s1212 + $0xc8] sm:$0xff]
        %v1231 = vld [vmem:[%s1212 + $0xd8] sm:$0xff]
        %v1232 = vld [vmem:[%s1212 + $0xe0] sm:$0xff]
        %v1233 = vld [vmem:[%s1212 + $0xf0] sm:$0xff]
        %v1234 = vld [vmem:[%s1212 + $0xf8] sm:$0xff]
        %v1235 = vld [vmem:[%s1212 + $0x108] sm:$0xff]
        %v1236 = vld [vmem:[%s1212 + $0x110] sm:$0xff]
        %v1237 = vld [vmem:[%s1212 + $0x120] sm:$0xff]
        %v1238 = vld [vmem:[%s1212 + $0x128] sm:$0xff]
        %v1239 = vld [vmem:[%s1212 + $0x138] sm:$0xff]
        %v1240 = vld [vmem:[%s1212 + $0x140] sm:$0xff]
        %v1241 = vld [vmem:[%s1212 + $0x150] sm:$0xff]
        %v1242 = vld [vmem:[%s1212 + $0x158] sm:$0xff]
        %v1243 = vld [vmem:[%s1212 + $0x168] sm:$0xff]
        %v1244 = vld [vmem:[%s1212 + $0x170] sm:$0xff]
        %1277 = vrot.lane.b32.xlu0 %v1213, 24
        %v1278 = vpop.permute.xlu0 %1277
        %1279 = vrot.lane.b32.xlu0 %v1214, 24
        %v1280 = vpop.permute.xlu0 %1279
        %1281 = vrot.lane.b32.xlu0 %v1215, 24
        %v1282 = vpop.permute.xlu0 %1281
        %1283 = vrot.lane.b32.xlu0 %v1216, 24
        %v1284 = vpop.permute.xlu0 %1283
        %1285 = vrot.lane.b32.xlu0 %v1217, 24
        %v1286 = vpop.permute.xlu0 %1285
        %1287 = vrot.lane.b32.xlu0 %v1218, 24
        %v1288 = vpop.permute.xlu0 %1287
        %1289 = vrot.lane.b32.xlu0 %v1219, 24
        %v1290 = vpop.permute.xlu0 %1289
        %1291 = vrot.lane.b32.xlu0 %v1220, 24
        %v1292 = vpop.permute.xlu0 %1291
        %1293 = vrot.lane.b32.xlu0 %v1221, 24
        %v1294 = vpop.permute.xlu0 %1293
        %1295 = vrot.lane.b32.xlu0 %v1222, 24
        %v1296 = vpop.permute.xlu0 %1295
        %1297 = vrot.lane.b32.xlu0 %v1223, 24
        %v1298 = vpop.permute.xlu0 %1297
        %1299 = vrot.lane.b32.xlu0 %v1224, 24
        %v1300 = vpop.permute.xlu0 %1299
        %1301 = vrot.lane.b32.xlu0 %v1225, 24
        %v1302 = vpop.permute.xlu0 %1301
        %1303 = vrot.lane.b32.xlu0 %v1226, 24
        %v1304 = vpop.permute.xlu0 %1303
        %1305 = vrot.lane.b32.xlu0 %v1227, 24
        %v1306 = vpop.permute.xlu0 %1305
        %1307 = vrot.lane.b32.xlu0 %v1228, 24
        %v1308 = vpop.permute.xlu0 %1307
        %1309 = vrot.lane.b32.xlu0 %v1229, 24
        %v1310 = vpop.permute.xlu0 %1309
        %1311 = vrot.lane.b32.xlu0 %v1230, 24
        %v1312 = vpop.permute.xlu0 %1311
        %1313 = vrot.lane.b32.xlu0 %v1231, 24
        %v1314 = vpop.permute.xlu0 %1313
        %1315 = vrot.lane.b32.xlu0 %v1232, 24
        %v1316 = vpop.permute.xlu0 %1315
        %1317 = vrot.lane.b32.xlu0 %v1233, 24
        %v1318 = vpop.permute.xlu0 %1317
        %1319 = vrot.lane.b32.xlu0 %v1234, 24
        %v1320 = vpop.permute.xlu0 %1319
        %1321 = vrot.lane.b32.xlu0 %v1235, 24
        %v1322 = vpop.permute.xlu0 %1321
        %1323 = vrot.lane.b32.xlu0 %v1236, 24
        %v1324 = vpop.permute.xlu0 %1323
        %1325 = vrot.lane.b32.xlu0 %v1237, 24
        %v1326 = vpop.permute.xlu0 %1325
        %1327 = vrot.lane.b32.xlu0 %v1238, 24
        %v1328 = vpop.permute.xlu0 %1327
        %1329 = vrot.lane.b32.xlu0 %v1239, 24
        %v1330 = vpop.permute.xlu0 %1329
        %1331 = vrot.lane.b32.xlu0 %v1240, 24
        %v1332 = vpop.permute.xlu0 %1331
        %1333 = vrot.lane.b32.xlu0 %v1241, 24
        %v1334 = vpop.permute.xlu0 %1333
        %1335 = vrot.lane.b32.xlu0 %v1242, 24
        %v1336 = vpop.permute.xlu0 %1335
        %1337 = vrot.lane.b32.xlu0 %v1243, 24
        %v1338 = vpop.permute.xlu0 %1337
        %1339 = vrot.lane.b32.xlu0 %v1244, 24
        %v1340 = vpop.permute.xlu0 %1339
        %vm1373 = vcmask 228544
        %1374 = vst.msk [vmem:[#allocation2] sm:$0xff] %vm1373, %v1278
        %1375 = vst.msk [vmem:[#allocation2 + $0x8] sm:$0xff] %vm1373, %v1280
        %1376 = vst.msk [vmem:[#allocation2 + $0x10] sm:$0xff] %vm1373, %v1282
        %1377 = vst.msk [vmem:[#allocation2 + $0x18] sm:$0xff] %vm1373, %v1284
        %1378 = vst.msk [vmem:[#allocation2 + $0x20] sm:$0xff] %vm1373, %v1286
        %1379 = vst.msk [vmem:[#allocation2 + $0x28] sm:$0xff] %vm1373, %v1288
        %1380 = vst.msk [vmem:[#allocation2 + $0x30] sm:$0xff] %vm1373, %v1290
        %1381 = vst.msk [vmem:[#allocation2 + $0x38] sm:$0xff] %vm1373, %v1292
        %1382 = vst.msk [vmem:[#allocation2 + $0x40] sm:$0xff] %vm1373, %v1294
        %1383 = vst.msk [vmem:[#allocation2 + $0x48] sm:$0xff] %vm1373, %v1296
        %1384 = vst.msk [vmem:[#allocation2 + $0x50] sm:$0xff] %vm1373, %v1298
        %1385 = vst.msk [vmem:[#allocation2 + $0x58] sm:$0xff] %vm1373, %v1300
        %1386 = vst.msk [vmem:[#allocation2 + $0x60] sm:$0xff] %vm1373, %v1302
        %1387 = vst.msk [vmem:[#allocation2 + $0x68] sm:$0xff] %vm1373, %v1304
        %1388 = vst.msk [vmem:[#allocation2 + $0x70] sm:$0xff] %vm1373, %v1306
        %1389 = vst.msk [vmem:[#allocation2 + $0x78] sm:$0xff] %vm1373, %v1308
        %1390 = vst.msk [vmem:[#allocation2 + $0x80] sm:$0xff] %vm1373, %v1310
        %1391 = vst.msk [vmem:[#allocation2 + $0x88] sm:$0xff] %vm1373, %v1312
        %1392 = vst.msk [vmem:[#allocation2 + $0x90] sm:$0xff] %vm1373, %v1314
        %1393 = vst.msk [vmem:[#allocation2 + $0x98] sm:$0xff] %vm1373, %v1316
        %1394 = vst.msk [vmem:[#allocation2 + $0xa0] sm:$0xff] %vm1373, %v1318
        %1395 = vst.msk [vmem:[#allocation2 + $0xa8] sm:$0xff] %vm1373, %v1320
        %1396 = vst.msk [vmem:[#allocation2 + $0xb0] sm:$0xff] %vm1373, %v1322
        %1397 = vst.msk [vmem:[#allocation2 + $0xb8] sm:$0xff] %vm1373, %v1324
        %1398 = vst.msk [vmem:[#allocation2 + $0xc0] sm:$0xff] %vm1373, %v1326
        %1399 = vst.msk [vmem:[#allocation2 + $0xc8] sm:$0xff] %vm1373, %v1328
        %1400 = vst.msk [vmem:[#allocation2 + $0xd0] sm:$0xff] %vm1373, %v1330
        %1401 = vst.msk [vmem:[#allocation2 + $0xd8] sm:$0xff] %vm1373, %v1332
        %1402 = vst.msk [vmem:[#allocation2 + $0xe0] sm:$0xff] %vm1373, %v1334
        %1403 = vst.msk [vmem:[#allocation2 + $0xe8] sm:$0xff] %vm1373, %v1336
        %1404 = vst.msk [vmem:[#allocation2 + $0xf0] sm:$0xff] %vm1373, %v1338
        %1405 = vst.msk [vmem:[#allocation2 + $0xf8] sm:$0xff] %vm1373, %v1340
        %v1406 = vld [vmem:[%s1212 + $0x1] sm:$0xff]
        %v1407 = vld [vmem:[%s1212 + $0x9] sm:$0xff]
        %v1408 = vld [vmem:[%s1212 + $0x19] sm:$0xff]
        %v1409 = vld [vmem:[%s1212 + $0x21] sm:$0xff]
        %v1410 = vld [vmem:[%s1212 + $0x31] sm:$0xff]
        %v1411 = vld [vmem:[%s1212 + $0x39] sm:$0xff]
        %v1412 = vld [vmem:[%s1212 + $0x49] sm:$0xff]
        %v1413 = vld [vmem:[%s1212 + $0x51] sm:$0xff]
        %v1414 = vld [vmem:[%s1212 + $0x61] sm:$0xff]
        %v1415 = vld [vmem:[%s1212 + $0x69] sm:$0xff]
        %v1416 = vld [vmem:[%s1212 + $0x79] sm:$0xff]
        %v1417 = vld [vmem:[%s1212 + $0x81] sm:$0xff]
        %v1418 = vld [vmem:[%s1212 + $0x91] sm:$0xff]
        %v1419 = vld [vmem:[%s1212 + $0x99] sm:$0xff]
        %v1420 = vld [vmem:[%s1212 + $0xa9] sm:$0xff]
        %v1421 = vld [vmem:[%s1212 + $0xb1] sm:$0xff]
        %v1422 = vld [vmem:[%s1212 + $0xc1] sm:$0xff]
        %v1423 = vld [vmem:[%s1212 + $0xc9] sm:$0xff]
        %v1424 = vld [vmem:[%s1212 + $0xd9] sm:$0xff]
        %v1425 = vld [vmem:[%s1212 + $0xe1] sm:$0xff]
        %v1426 = vld [vmem:[%s1212 + $0xf1] sm:$0xff]
        %v1427 = vld [vmem:[%s1212 + $0xf9] sm:$0xff]
        %v1428 = vld [vmem:[%s1212 + $0x109] sm:$0xff]
        %v1429 = vld [vmem:[%s1212 + $0x111] sm:$0xff]
        %v1430 = vld [vmem:[%s1212 + $0x121] sm:$0xff]
        %v1431 = vld [vmem:[%s1212 + $0x129] sm:$0xff]
        %v1432 = vld [vmem:[%s1212 + $0x139] sm:$0xff]
        %v1433 = vld [vmem:[%s1212 + $0x141] sm:$0xff]
        %v1434 = vld [vmem:[%s1212 + $0x151] sm:$0xff]
        %v1435 = vld [vmem:[%s1212 + $0x159] sm:$0xff]
        %v1436 = vld [vmem:[%s1212 + $0x169] sm:$0xff]
        %v1437 = vld [vmem:[%s1212 + $0x171] sm:$0xff]
        %1470 = vrot.lane.b32.xlu0 %v1406, 28
        %v1471 = vpop.permute.xlu0 %1470
        %1472 = vrot.lane.b32.xlu0 %v1407, 28
        %v1473 = vpop.permute.xlu0 %1472
        %1474 = vrot.lane.b32.xlu0 %v1408, 28
        %v1475 = vpop.permute.xlu0 %1474
        %1476 = vrot.lane.b32.xlu0 %v1409, 28
        %v1477 = vpop.permute.xlu0 %1476
        %1478 = vrot.lane.b32.xlu0 %v1410, 28
        %v1479 = vpop.permute.xlu0 %1478
        %1480 = vrot.lane.b32.xlu0 %v1411, 28
        %v1481 = vpop.permute.xlu0 %1480
        %1482 = vrot.lane.b32.xlu0 %v1412, 28
        %v1483 = vpop.permute.xlu0 %1482
        %1484 = vrot.lane.b32.xlu0 %v1413, 28
        %v1485 = vpop.permute.xlu0 %1484
        %1486 = vrot.lane.b32.xlu0 %v1414, 28
        %v1487 = vpop.permute.xlu0 %1486
        %1488 = vrot.lane.b32.xlu0 %v1415, 28
        %v1489 = vpop.permute.xlu0 %1488
        %1490 = vrot.lane.b32.xlu0 %v1416, 28
        %v1491 = vpop.permute.xlu0 %1490
        %1492 = vrot.lane.b32.xlu0 %v1417, 28
        %v1493 = vpop.permute.xlu0 %1492
        %1494 = vrot.lane.b32.xlu0 %v1418, 28
        %v1495 = vpop.permute.xlu0 %1494
        %1496 = vrot.lane.b32.xlu0 %v1419, 28
        %v1497 = vpop.permute.xlu0 %1496
        %1498 = vrot.lane.b32.xlu0 %v1420, 28
        %v1499 = vpop.permute.xlu0 %1498
        %1500 = vrot.lane.b32.xlu0 %v1421, 28
        %v1501 = vpop.permute.xlu0 %1500
        %1502 = vrot.lane.b32.xlu0 %v1422, 28
        %v1503 = vpop.permute.xlu0 %1502
        %1504 = vrot.lane.b32.xlu0 %v1423, 28
        %v1505 = vpop.permute.xlu0 %1504
        %1506 = vrot.lane.b32.xlu0 %v1424, 28
        %v1507 = vpop.permute.xlu0 %1506
        %1508 = vrot.lane.b32.xlu0 %v1425, 28
        %v1509 = vpop.permute.xlu0 %1508
        %1510 = vrot.lane.b32.xlu0 %v1426, 28
        %v1511 = vpop.permute.xlu0 %1510
        %1512 = vrot.lane.b32.xlu0 %v1427, 28
        %v1513 = vpop.permute.xlu0 %1512
        %1514 = vrot.lane.b32.xlu0 %v1428, 28
        %v1515 = vpop.permute.xlu0 %1514
        %1516 = vrot.lane.b32.xlu0 %v1429, 28
        %v1517 = vpop.permute.xlu0 %1516
        %1518 = vrot.lane.b32.xlu0 %v1430, 28
        %v1519 = vpop.permute.xlu0 %1518
        %1520 = vrot.lane.b32.xlu0 %v1431, 28
        %v1521 = vpop.permute.xlu0 %1520
        %1522 = vrot.lane.b32.xlu0 %v1432, 28
        %v1523 = vpop.permute.xlu0 %1522
        %1524 = vrot.lane.b32.xlu0 %v1433, 28
        %v1525 = vpop.permute.xlu0 %1524
        %1526 = vrot.lane.b32.xlu0 %v1434, 28
        %v1527 = vpop.permute.xlu0 %1526
        %1528 = vrot.lane.b32.xlu0 %v1435, 28
        %v1529 = vpop.permute.xlu0 %1528
        %1530 = vrot.lane.b32.xlu0 %v1436, 28
        %v1531 = vpop.permute.xlu0 %1530
        %1532 = vrot.lane.b32.xlu0 %v1437, 28
        %v1533 = vpop.permute.xlu0 %1532
        %vm1566 = vcmask 261344
        %1567 = vst.msk [vmem:[#allocation2] sm:$0xff] %vm1566, %v1471
        %1568 = vst.msk [vmem:[#allocation2 + $0x8] sm:$0xff] %vm1566, %v1473
        %1569 = vst.msk [vmem:[#allocation2 + $0x10] sm:$0xff] %vm1566, %v1475
        %1570 = vst.msk [vmem:[#allocation2 + $0x18] sm:$0xff] %vm1566, %v1477
        %1571 = vst.msk [vmem:[#allocation2 + $0x20] sm:$0xff] %vm1566, %v1479
        %1572 = vst.msk [vmem:[#allocation2 + $0x28] sm:$0xff] %vm1566, %v1481
        %1573 = vst.msk [vmem:[#allocation2 + $0x30] sm:$0xff] %vm1566, %v1483
        %1574 = vst.msk [vmem:[#allocation2 + $0x38] sm:$0xff] %vm1566, %v1485
        %1575 = vst.msk [vmem:[#allocation2 + $0x40] sm:$0xff] %vm1566, %v1487
        %1576 = vst.msk [vmem:[#allocation2 + $0x48] sm:$0xff] %vm1566, %v1489
        %1577 = vst.msk [vmem:[#allocation2 + $0x50] sm:$0xff] %vm1566, %v1491
        %1578 = vst.msk [vmem:[#allocation2 + $0x58] sm:$0xff] %vm1566, %v1493
        %1579 = vst.msk [vmem:[#allocation2 + $0x60] sm:$0xff] %vm1566, %v1495
        %1580 = vst.msk [vmem:[#allocation2 + $0x68] sm:$0xff] %vm1566, %v1497
        %1581 = vst.msk [vmem:[#allocation2 + $0x70] sm:$0xff] %vm1566, %v1499
        %1582 = vst.msk [vmem:[#allocation2 + $0x78] sm:$0xff] %vm1566, %v1501
        %1583 = vst.msk [vmem:[#allocation2 + $0x80] sm:$0xff] %vm1566, %v1503
        %1584 = vst.msk [vmem:[#allocation2 + $0x88] sm:$0xff] %vm1566, %v1505
        %1585 = vst.msk [vmem:[#allocation2 + $0x90] sm:$0xff] %vm1566, %v1507
        %1586 = vst.msk [vmem:[#allocation2 + $0x98] sm:$0xff] %vm1566, %v1509
        %1587 = vst.msk [vmem:[#allocation2 + $0xa0] sm:$0xff] %vm1566, %v1511
        %1588 = vst.msk [vmem:[#allocation2 + $0xa8] sm:$0xff] %vm1566, %v1513
        %1589 = vst.msk [vmem:[#allocation2 + $0xb0] sm:$0xff] %vm1566, %v1515
        %1590 = vst.msk [vmem:[#allocation2 + $0xb8] sm:$0xff] %vm1566, %v1517
        %1591 = vst.msk [vmem:[#allocation2 + $0xc0] sm:$0xff] %vm1566, %v1519
        %1592 = vst.msk [vmem:[#allocation2 + $0xc8] sm:$0xff] %vm1566, %v1521
        %1593 = vst.msk [vmem:[#allocation2 + $0xd0] sm:$0xff] %vm1566, %v1523
        %1594 = vst.msk [vmem:[#allocation2 + $0xd8] sm:$0xff] %vm1566, %v1525
        %1595 = vst.msk [vmem:[#allocation2 + $0xe0] sm:$0xff] %vm1566, %v1527
        %1596 = vst.msk [vmem:[#allocation2 + $0xe8] sm:$0xff] %vm1566, %v1529
        %1597 = vst.msk [vmem:[#allocation2 + $0xf0] sm:$0xff] %vm1566, %v1531
        %1598 = vst.msk [vmem:[#allocation2 + $0xf8] sm:$0xff] %vm1566, %v1533
        %v1599 = vld [vmem:[%s1212 + $0x2] sm:$0xff]
        %v1600 = vld [vmem:[%s1212 + $0xa] sm:$0xff]
        %v1601 = vld [vmem:[%s1212 + $0x1a] sm:$0xff]
        %v1602 = vld [vmem:[%s1212 + $0x22] sm:$0xff]
        %v1603 = vld [vmem:[%s1212 + $0x32] sm:$0xff]
        %v1604 = vld [vmem:[%s1212 + $0x3a] sm:$0xff]
        %v1605 = vld [vmem:[%s1212 + $0x4a] sm:$0xff]
        %v1606 = vld [vmem:[%s1212 + $0x52] sm:$0xff]
        %v1607 = vld [vmem:[%s1212 + $0x62] sm:$0xff]
        %v1608 = vld [vmem:[%s1212 + $0x6a] sm:$0xff]
        %v1609 = vld [vmem:[%s1212 + $0x7a] sm:$0xff]
        %v1610 = vld [vmem:[%s1212 + $0x82] sm:$0xff]
        %v1611 = vld [vmem:[%s1212 + $0x92] sm:$0xff]
        %v1612 = vld [vmem:[%s1212 + $0x9a] sm:$0xff]
        %v1613 = vld [vmem:[%s1212 + $0xaa] sm:$0xff]
        %v1614 = vld [vmem:[%s1212 + $0xb2] sm:$0xff]
        %v1615 = vld [vmem:[%s1212 + $0xc2] sm:$0xff]
        %v1616 = vld [vmem:[%s1212 + $0xca] sm:$0xff]
        %v1617 = vld [vmem:[%s1212 + $0xda] sm:$0xff]
        %v1618 = vld [vmem:[%s1212 + $0xe2] sm:$0xff]
        %v1619 = vld [vmem:[%s1212 + $0xf2] sm:$0xff]
        %v1620 = vld [vmem:[%s1212 + $0xfa] sm:$0xff]
        %v1621 = vld [vmem:[%s1212 + $0x10a] sm:$0xff]
        %v1622 = vld [vmem:[%s1212 + $0x112] sm:$0xff]
        %v1623 = vld [vmem:[%s1212 + $0x122] sm:$0xff]
        %v1624 = vld [vmem:[%s1212 + $0x12a] sm:$0xff]
        %v1625 = vld [vmem:[%s1212 + $0x13a] sm:$0xff]
        %v1626 = vld [vmem:[%s1212 + $0x142] sm:$0xff]
        %v1627 = vld [vmem:[%s1212 + $0x152] sm:$0xff]
        %v1628 = vld [vmem:[%s1212 + $0x15a] sm:$0xff]
        %v1629 = vld [vmem:[%s1212 + $0x16a] sm:$0xff]
        %v1630 = vld [vmem:[%s1212 + $0x172] sm:$0xff]
        %1663 = vrot.lane.b32.xlu0 %v1599, 32
        %v1664 = vpop.permute.xlu0 %1663
        %1665 = vrot.lane.b32.xlu0 %v1600, 32
        %v1666 = vpop.permute.xlu0 %1665
        %1667 = vrot.lane.b32.xlu0 %v1601, 32
        %v1668 = vpop.permute.xlu0 %1667
        %1669 = vrot.lane.b32.xlu0 %v1602, 32
        %v1670 = vpop.permute.xlu0 %1669
        %1671 = vrot.lane.b32.xlu0 %v1603, 32
        %v1672 = vpop.permute.xlu0 %1671
        %1673 = vrot.lane.b32.xlu0 %v1604, 32
        %v1674 = vpop.permute.xlu0 %1673
        %1675 = vrot.lane.b32.xlu0 %v1605, 32
        %v1676 = vpop.permute.xlu0 %1675
        %1677 = vrot.lane.b32.xlu0 %v1606, 32
        %v1678 = vpop.permute.xlu0 %1677
        %1679 = vrot.lane.b32.xlu0 %v1607, 32
        %v1680 = vpop.permute.xlu0 %1679
        %1681 = vrot.lane.b32.xlu0 %v1608, 32
        %v1682 = vpop.permute.xlu0 %1681
        %1683 = vrot.lane.b32.xlu0 %v1609, 32
        %v1684 = vpop.permute.xlu0 %1683
        %1685 = vrot.lane.b32.xlu0 %v1610, 32
        %v1686 = vpop.permute.xlu0 %1685
        %1687 = vrot.lane.b32.xlu0 %v1611, 32
        %v1688 = vpop.permute.xlu0 %1687
        %1689 = vrot.lane.b32.xlu0 %v1612, 32
        %v1690 = vpop.permute.xlu0 %1689
        %1691 = vrot.lane.b32.xlu0 %v1613, 32
        %v1692 = vpop.permute.xlu0 %1691
        %1693 = vrot.lane.b32.xlu0 %v1614, 32
        %v1694 = vpop.permute.xlu0 %1693
        %1695 = vrot.lane.b32.xlu0 %v1615, 32
        %v1696 = vpop.permute.xlu0 %1695
        %1697 = vrot.lane.b32.xlu0 %v1616, 32
        %v1698 = vpop.permute.xlu0 %1697
        %1699 = vrot.lane.b32.xlu0 %v1617, 32
        %v1700 = vpop.permute.xlu0 %1699
        %1701 = vrot.lane.b32.xlu0 %v1618, 32
        %v1702 = vpop.permute.xlu0 %1701
        %1703 = vrot.lane.b32.xlu0 %v1619, 32
        %v1704 = vpop.permute.xlu0 %1703
        %1705 = vrot.lane.b32.xlu0 %v1620, 32
        %v1706 = vpop.permute.xlu0 %1705
        %1707 = vrot.lane.b32.xlu0 %v1621, 32
        %v1708 = vpop.permute.xlu0 %1707
        %1709 = vrot.lane.b32.xlu0 %v1622, 32
        %v1710 = vpop.permute.xlu0 %1709
        %1711 = vrot.lane.b32.xlu0 %v1623, 32
        %v1712 = vpop.permute.xlu0 %1711
        %1713 = vrot.lane.b32.xlu0 %v1624, 32
        %v1714 = vpop.permute.xlu0 %1713
        %1715 = vrot.lane.b32.xlu0 %v1625, 32
        %v1716 = vpop.permute.xlu0 %1715
        %1717 = vrot.lane.b32.xlu0 %v1626, 32
        %v1718 = vpop.permute.xlu0 %1717
        %1719 = vrot.lane.b32.xlu0 %v1627, 32
        %v1720 = vpop.permute.xlu0 %1719
        %1721 = vrot.lane.b32.xlu0 %v1628, 32
        %v1722 = vpop.permute.xlu0 %1721
        %1723 = vrot.lane.b32.xlu0 %v1629, 32
        %v1724 = vpop.permute.xlu0 %1723
        %1725 = vrot.lane.b32.xlu0 %v1630, 32
        %v1726 = vpop.permute.xlu0 %1725
        %vm1759 = vcmask 294144
        %1760 = vst.msk [vmem:[#allocation2] sm:$0xff] %vm1759, %v1664
        %1761 = vst.msk [vmem:[#allocation2 + $0x8] sm:$0xff] %vm1759, %v1666
        %1762 = vst.msk [vmem:[#allocation2 + $0x10] sm:$0xff] %vm1759, %v1668
        %1763 = vst.msk [vmem:[#allocation2 + $0x18] sm:$0xff] %vm1759, %v1670
        %1764 = vst.msk [vmem:[#allocation2 + $0x20] sm:$0xff] %vm1759, %v1672
        %1765 = vst.msk [vmem:[#allocation2 + $0x28] sm:$0xff] %vm1759, %v1674
        %1766 = vst.msk [vmem:[#allocation2 + $0x30] sm:$0xff] %vm1759, %v1676
        %1767 = vst.msk [vmem:[#allocation2 + $0x38] sm:$0xff] %vm1759, %v1678
        %1768 = vst.msk [vmem:[#allocation2 + $0x40] sm:$0xff] %vm1759, %v1680
        %1769 = vst.msk [vmem:[#allocation2 + $0x48] sm:$0xff] %vm1759, %v1682
        %1770 = vst.msk [vmem:[#allocation2 + $0x50] sm:$0xff] %vm1759, %v1684
        %1771 = vst.msk [vmem:[#allocation2 + $0x58] sm:$0xff] %vm1759, %v1686
        %1772 = vst.msk [vmem:[#allocation2 + $0x60] sm:$0xff] %vm1759, %v1688
        %1773 = vst.msk [vmem:[#allocation2 + $0x68] sm:$0xff] %vm1759, %v1690
        %1774 = vst.msk [vmem:[#allocation2 + $0x70] sm:$0xff] %vm1759, %v1692
        %1775 = vst.msk [vmem:[#allocation2 + $0x78] sm:$0xff] %vm1759, %v1694
        %1776 = vst.msk [vmem:[#allocation2 + $0x80] sm:$0xff] %vm1759, %v1696
        %1777 = vst.msk [vmem:[#allocation2 + $0x88] sm:$0xff] %vm1759, %v1698
        %1778 = vst.msk [vmem:[#allocation2 + $0x90] sm:$0xff] %vm1759, %v1700
        %1779 = vst.msk [vmem:[#allocation2 + $0x98] sm:$0xff] %vm1759, %v1702
        %1780 = vst.msk [vmem:[#allocation2 + $0xa0] sm:$0xff] %vm1759, %v1704
        %1781 = vst.msk [vmem:[#allocation2 + $0xa8] sm:$0xff] %vm1759, %v1706
        %1782 = vst.msk [vmem:[#allocation2 + $0xb0] sm:$0xff] %vm1759, %v1708
        %1783 = vst.msk [vmem:[#allocation2 + $0xb8] sm:$0xff] %vm1759, %v1710
        %1784 = vst.msk [vmem:[#allocation2 + $0xc0] sm:$0xff] %vm1759, %v1712
        %1785 = vst.msk [vmem:[#allocation2 + $0xc8] sm:$0xff] %vm1759, %v1714
        %1786 = vst.msk [vmem:[#allocation2 + $0xd0] sm:$0xff] %vm1759, %v1716
        %1787 = vst.msk [vmem:[#allocation2 + $0xd8] sm:$0xff] %vm1759, %v1718
        %1788 = vst.msk [vmem:[#allocation2 + $0xe0] sm:$0xff] %vm1759, %v1720
        %1789 = vst.msk [vmem:[#allocation2 + $0xe8] sm:$0xff] %vm1759, %v1722
        %1790 = vst.msk [vmem:[#allocation2 + $0xf0] sm:$0xff] %vm1759, %v1724
        %1791 = vst.msk [vmem:[#allocation2 + $0xf8] sm:$0xff] %vm1759, %v1726
        %v1792 = vld [vmem:[#allocation2] sm:$0xff]
        %v1793 = vld [vmem:[#allocation2 + $0x8] sm:$0xff]
        %v1794 = vld [vmem:[#allocation2 + $0x10] sm:$0xff]
        %v1795 = vld [vmem:[#allocation2 + $0x18] sm:$0xff]
        %v1796 = vld [vmem:[#allocation2 + $0x20] sm:$0xff]
        %v1797 = vld [vmem:[#allocation2 + $0x28] sm:$0xff]
        %v1798 = vld [vmem:[#allocation2 + $0x30] sm:$0xff]
        %v1799 = vld [vmem:[#allocation2 + $0x38] sm:$0xff]
        %v1800 = vld [vmem:[#allocation2 + $0x40] sm:$0xff]
        %v1801 = vld [vmem:[#allocation2 + $0x48] sm:$0xff]
        %v1802 = vld [vmem:[#allocation2 + $0x50] sm:$0xff]
        %v1803 = vld [vmem:[#allocation2 + $0x58] sm:$0xff]
        %v1804 = vld [vmem:[#allocation2 + $0x60] sm:$0xff]
        %v1805 = vld [vmem:[#allocation2 + $0x68] sm:$0xff]
        %v1806 = vld [vmem:[#allocation2 + $0x70] sm:$0xff]
        %v1807 = vld [vmem:[#allocation2 + $0x78] sm:$0xff]
        %v1808 = vld [vmem:[#allocation2 + $0x80] sm:$0xff]
        %v1809 = vld [vmem:[#allocation2 + $0x88] sm:$0xff]
        %v1810 = vld [vmem:[#allocation2 + $0x90] sm:$0xff]
        %v1811 = vld [vmem:[#allocation2 + $0x98] sm:$0xff]
        %v1812 = vld [vmem:[#allocation2 + $0xa0] sm:$0xff]
        %v1813 = vld [vmem:[#allocation2 + $0xa8] sm:$0xff]
        %v1814 = vld [vmem:[#allocation2 + $0xb0] sm:$0xff]
        %v1815 = vld [vmem:[#allocation2 + $0xb8] sm:$0xff]
        %v1816 = vld [vmem:[#allocation2 + $0xc0] sm:$0xff]
        %v1817 = vld [vmem:[#allocation2 + $0xc8] sm:$0xff]
        %v1818 = vld [vmem:[#allocation2 + $0xd0] sm:$0xff]
        %v1819 = vld [vmem:[#allocation2 + $0xd8] sm:$0xff]
        %v1820 = vld [vmem:[#allocation2 + $0xe0] sm:$0xff]
        %v1821 = vld [vmem:[#allocation2 + $0xe8] sm:$0xff]
        %v1822 = vld [vmem:[#allocation2 + $0xf0] sm:$0xff]
        %v1823 = vld [vmem:[#allocation2 + $0xf8] sm:$0xff]
        %v1824 = vpack.c.bf16 %v1793, %v1792
        %v1825 = vpack.c.bf16 %v1795, %v1794
        %v1826 = vpack.c.bf16 %v1797, %v1796
        %v1827 = vpack.c.bf16 %v1799, %v1798
        %v1828 = vpack.c.bf16 %v1801, %v1800
        %v1829 = vpack.c.bf16 %v1803, %v1802
        %v1830 = vpack.c.bf16 %v1805, %v1804
        %v1831 = vpack.c.bf16 %v1807, %v1806
        %v1832 = vpack.c.bf16 %v1809, %v1808
        %v1833 = vpack.c.bf16 %v1811, %v1810
        %v1834 = vpack.c.bf16 %v1813, %v1812
        %v1835 = vpack.c.bf16 %v1815, %v1814
        %v1836 = vpack.c.bf16 %v1817, %v1816
        %v1837 = vpack.c.bf16 %v1819, %v1818
        %v1838 = vpack.c.bf16 %v1821, %v1820
        %v1839 = vpack.c.bf16 %v1823, %v1822
        %v1840 = vld [vmem:[%s1] sm:$0xf]
        %v1841 = vld [vmem:[%s1 + $0x4] sm:$0xf]
        %v1842 = vld [vmem:[%s1 + $0x8] sm:$0xf]
        %v1843 = vld [vmem:[%s1 + $0xc] sm:$0xf]
        %v1844 = vld [vmem:[%s1 + $0x10] sm:$0x3]
        %v1850 = vunpack.c.l.b16 %v1840
        %v1851 = vunpack.c.l.b16 %v1841
        %v1852 = vunpack.c.l.b16 %v1842
        %v1853 = vunpack.c.l.b16 %v1843
        %v1854 = vunpack.c.l.b16 %v1844
        %v1855 = vpack.c.b16 %v1851, %v1850
        %v1856 = vpack.c.b16 %v1853, %v1852
        %v1857 = vpack.c.b16 %v1854, %v1854
        %vm1860 = vcmask 293888
        %v1862 = vsel %vm1860, %v1824, 0
        %v1865 = vsel %vm1860, %v1825, 0
        %v1868 = vsel %vm1860, %v1826, 0
        %v1871 = vsel %vm1860, %v1827, 0
        %v1874 = vsel %vm1860, %v1828, 0
        %v1877 = vsel %vm1860, %v1829, 0
        %v1880 = vsel %vm1860, %v1830, 0
        %v1883 = vsel %vm1860, %v1831, 0
        %v1886 = vsel %vm1860, %v1832, 0
        %v1889 = vsel %vm1860, %v1833, 0
        %v1892 = vsel %vm1860, %v1834, 0
        %v1895 = vsel %vm1860, %v1835, 0
        %v1898 = vsel %vm1860, %v1836, 0
        %v1901 = vsel %vm1860, %v1837, 0
        %v1904 = vsel %vm1860, %v1838, 0
        %v1907 = vsel %vm1860, %v1839, 0
        %vm1909 = vcmask 1041408
        %v1911 = vsel %vm1909, %v1857, 0
        %1913 = vmatprep.subr.bf16.mxu0 0
        %1914 = vmatpush1.bf16.msra.mxu0 %v1855
        %1915 = vmatprep.subr.bf16.mxu0 0
        %1916 = vmatpush1.bf16.msra.mxu0 %v1856
        %1917 = vmatprep.subr.bf16.mxu0 0
        %1918 = vmatpush1.bf16.msra.mxu0 %v1911
        %1919 = vmatprep.subr.bf16.mxu0 0
        %1920 = vmatpush1.bf16.msra.mxu0 0
        %1921 = vmatprep.subr.bf16.mxu0 0
        %1922 = vmatpush1.bf16.msra.mxu0 0
        %1923 = vmatprep.subr.bf16.mxu0 0
        %1924 = vmatpush1.bf16.msra.mxu0 0
        %1925 = vmatprep.subr.bf16.mxu0 0
        %1926 = vmatpush1.bf16.msra.mxu0 0
        %1927 = vmatprep.subr.bf16.mxu0 0
        %1928 = vmatpush1.bf16.msra.mxu0 0
        %1929 = vmatprep.subr.bf16.mxu0 0
        %1930 = vmatpush1.bf16.msra.mxu0 0
        %1931 = vmatprep.subr.bf16.mxu0 0
        %1932 = vmatpush1.bf16.msra.mxu0 0
        %1933 = vmatprep.subr.bf16.mxu0 0
        %1934 = vmatpush1.bf16.msra.mxu0 0
        %1935 = vmatprep.subr.bf16.mxu0 0
        %1936 = vmatpush1.bf16.msra.mxu0 0
        %1937 = vmatprep.subr.bf16.mxu0 0
        %1938 = vmatpush1.bf16.msra.mxu0 0
        %1939 = vmatprep.subr.bf16.mxu0 0
        %1940 = vmatpush1.bf16.msra.mxu0 0
        %1941 = vmatprep.subr.bf16.mxu0 0
        %1942 = vmatpush1.bf16.msra.mxu0 0
        %1943 = vmatprep.subr.bf16.mxu0 0
        %1944 = vmatpush1.bf16.msra.mxu0 0
        %1945 = vmatprep.mubr.bf16.mxu0 0
        %1946 = vmatmul.mubr.bf16.gmra.mrb[0].mxu0 %v1862
        %v1947 = vpop.f32.mrb[0].mxu0
        %v1948 = vadd.f32 0.0, %v1947
        %v1949 = vpop.f32.mrb[0].mxu0
        %v1950 = vpop.f32.mrb[0].mxu0
        %v1951 = vadd.f32 0.0, %v1950
        %v1952 = vpop.f32.mrb[0].mxu0
        %1953 = vmatprep.mubr.bf16.mxu0 0
        %1954 = vmatmul.mubr.bf16.gmra.mrb[0].mxu0 %v1865
        %v1955 = vpop.f32.mrb[0].mxu0
        %v1956 = vadd.f32 0.0, %v1955
        %v1957 = vpop.f32.mrb[0].mxu0
        %v1958 = vpop.f32.mrb[0].mxu0
        %v1959 = vadd.f32 0.0, %v1958
        %v1960 = vpop.f32.mrb[0].mxu0
        %1961 = vmatprep.mubr.bf16.mxu0 0
        %1962 = vmatmul.mubr.bf16.gmra.mrb[0].mxu0 %v1868
        %v1963 = vpop.f32.mrb[0].mxu0
        %v1964 = vadd.f32 0.0, %v1963
        %v1965 = vpop.f32.mrb[0].mxu0
        %v1966 = vpop.f32.mrb[0].mxu0
        %v1967 = vadd.f32 0.0, %v1966
        %v1968 = vpop.f32.mrb[0].mxu0
        %1969 = vmatprep.mubr.bf16.mxu0 0
        %1970 = vmatmul.mubr.bf16.gmra.mrb[0].mxu0 %v1871
        %v1971 = vpop.f32.mrb[0].mxu0
        %v1972 = vadd.f32 0.0, %v1971
        %v1973 = vpop.f32.mrb[0].mxu0
        %v1974 = vpop.f32.mrb[0].mxu0
        %v1975 = vadd.f32 0.0, %v1974
        %v1976 = vpop.f32.mrb[0].mxu0
        %1977 = vmatprep.mubr.bf16.mxu0 0
        %1978 = vmatmul.mubr.bf16.gmra.mrb[0].mxu0 %v1874
        %v1979 = vpop.f32.mrb[0].mxu0
        %v1980 = vadd.f32 0.0, %v1979
        %v1981 = vpop.f32.mrb[0].mxu0
        %v1982 = vpop.f32.mrb[0].mxu0
        %v1983 = vadd.f32 0.0, %v1982
        %v1984 = vpop.f32.mrb[0].mxu0
        %1985 = vmatprep.mubr.bf16.mxu0 0
        %1986 = vmatmul.mubr.bf16.gmra.mrb[0].mxu0 %v1877
        %v1987 = vpop.f32.mrb[0].mxu0
        %v1988 = vadd.f32 0.0, %v1987
        %v1989 = vpop.f32.mrb[0].mxu0
        %v1990 = vpop.f32.mrb[0].mxu0
        %v1991 = vadd.f32 0.0, %v1990
        %v1992 = vpop.f32.mrb[0].mxu0
        %1993 = vmatprep.mubr.bf16.mxu0 0
        %1994 = vmatmul.mubr.bf16.gmra.mrb[0].mxu0 %v1880
        %v1995 = vpop.f32.mrb[0].mxu0
        %v1996 = vadd.f32 0.0, %v1995
        %v1997 = vpop.f32.mrb[0].mxu0
        %v1998 = vpop.f32.mrb[0].mxu0
        %v1999 = vadd.f32 0.0, %v1998
        %v2000 = vpop.f32.mrb[0].mxu0
        %2001 = vmatprep.mubr.bf16.mxu0 0
        %2002 = vmatmul.mubr.bf16.gmra.mrb[0].mxu0 %v1883
        %v2003 = vpop.f32.mrb[0].mxu0
        %v2004 = vadd.f32 0.0, %v2003
        %v2005 = vpop.f32.mrb[0].mxu0
        %v2006 = vpop.f32.mrb[0].mxu0
        %v2007 = vadd.f32 0.0, %v2006
        %v2008 = vpop.f32.mrb[0].mxu0
        %2009 = vmatprep.mubr.bf16.mxu0 0
        %2010 = vmatmul.mubr.bf16.gmra.mrb[0].mxu0 %v1886
        %v2011 = vpop.f32.mrb[0].mxu0
        %v2012 = vadd.f32 0.0, %v2011
        %v2013 = vpop.f32.mrb[0].mxu0
        %v2014 = vpop.f32.mrb[0].mxu0
        %v2015 = vadd.f32 0.0, %v2014
        %v2016 = vpop.f32.mrb[0].mxu0
        %2017 = vmatprep.mubr.bf16.mxu0 0
        %2018 = vmatmul.mubr.bf16.gmra.mrb[0].mxu0 %v1889
        %v2019 = vpop.f32.mrb[0].mxu0
        %v2020 = vadd.f32 0.0, %v2019
        %v2021 = vpop.f32.mrb[0].mxu0
        %v2022 = vpop.f32.mrb[0].mxu0
        %v2023 = vadd.f32 0.0, %v2022
        %v2024 = vpop.f32.mrb[0].mxu0
        %2025 = vmatprep.mubr.bf16.mxu0 0
        %2026 = vmatmul.mubr.bf16.gmra.mrb[0].mxu0 %v1892
        %v2027 = vpop.f32.mrb[0].mxu0
        %v2028 = vadd.f32 0.0, %v2027
        %v2029 = vpop.f32.mrb[0].mxu0
        %v2030 = vpop.f32.mrb[0].mxu0
        %v2031 = vadd.f32 0.0, %v2030
        %v2032 = vpop.f32.mrb[0].mxu0
        %2033 = vmatprep.mubr.bf16.mxu0 0
        %2034 = vmatmul.mubr.bf16.gmra.mrb[0].mxu0 %v1895
        %v2035 = vpop.f32.mrb[0].mxu0
        %v2036 = vadd.f32 0.0, %v2035
        %v2037 = vpop.f32.mrb[0].mxu0
        %v2038 = vpop.f32.mrb[0].mxu0
        %v2039 = vadd.f32 0.0, %v2038
        %v2040 = vpop.f32.mrb[0].mxu0
        %2041 = vmatprep.mubr.bf16.mxu0 0
        %2042 = vmatmul.mubr.bf16.gmra.mrb[0].mxu0 %v1898
        %v2043 = vpop.f32.mrb[0].mxu0
        %v2044 = vadd.f32 0.0, %v2043
        %v2045 = vpop.f32.mrb[0].mxu0
        %v2046 = vpop.f32.mrb[0].mxu0
        %v2047 = vadd.f32 0.0, %v2046
        %v2048 = vpop.f32.mrb[0].mxu0
        %2049 = vmatprep.mubr.bf16.mxu0 0
        %2050 = vmatmul.mubr.bf16.gmra.mrb[0].mxu0 %v1901
        %v2051 = vpop.f32.mrb[0].mxu0
        %v2052 = vadd.f32 0.0, %v2051
        %v2053 = vpop.f32.mrb[0].mxu0
        %v2054 = vpop.f32.mrb[0].mxu0
        %v2055 = vadd.f32 0.0, %v2054
        %v2056 = vpop.f32.mrb[0].mxu0
        %2057 = vmatprep.mubr.bf16.mxu0 0
        %2058 = vmatmul.mubr.bf16.gmra.mrb[0].mxu0 %v1904
        %v2059 = vpop.f32.mrb[0].mxu0
        %v2060 = vadd.f32 0.0, %v2059
        %v2061 = vpop.f32.mrb[0].mxu0
        %v2062 = vpop.f32.mrb[0].mxu0
        %v2063 = vadd.f32 0.0, %v2062
        %v2064 = vpop.f32.mrb[0].mxu0
        %2065 = vmatprep.mubr.bf16.mxu0 0
        %2066 = vmatmul.mubr.bf16.gmra.mrb[0].mxu0 %v1907
        %v2067 = vpop.f32.mrb[0].mxu0
        %v2068 = vadd.f32 0.0, %v2067
        %v2069 = vpop.f32.mrb[0].mxu0
        %v2070 = vpop.f32.mrb[0].mxu0
        %v2071 = vadd.f32 0.0, %v2070
        %v2072 = vpop.f32.mrb[0].mxu0
        %2073 = vdwg.mxu0
        %v2074 = vpack.c.bf16 %v1951, %v1948
        %v2075 = vpack.c.bf16 %v1959, %v1956
        %v2076 = vpack.c.bf16 %v1967, %v1964
        %v2077 = vpack.c.bf16 %v1975, %v1972
        %v2078 = vpack.c.bf16 %v1983, %v1980
        %v2079 = vpack.c.bf16 %v1991, %v1988
        %v2080 = vpack.c.bf16 %v1999, %v1996
        %v2081 = vpack.c.bf16 %v2007, %v2004
        %v2082 = vpack.c.bf16 %v2015, %v2012
        %v2083 = vpack.c.bf16 %v2023, %v2020
        %v2084 = vpack.c.bf16 %v2031, %v2028
        %v2085 = vpack.c.bf16 %v2039, %v2036
        %v2086 = vpack.c.bf16 %v2047, %v2044
        %v2087 = vpack.c.bf16 %v2055, %v2052
        %v2088 = vpack.c.bf16 %v2063, %v2060
        %v2089 = vpack.c.bf16 %v2071, %v2068
        %v2106 = vunpack.c.l.b16 %v2074
        %v2107 = vunpack.c.h.b16 %v2074
        %v2108 = vunpack.c.l.b16 %v2075
        %v2109 = vunpack.c.h.b16 %v2075
        %v2110 = vunpack.c.l.b16 %v2076
        %v2111 = vunpack.c.h.b16 %v2076
        %v2112 = vunpack.c.l.b16 %v2077
        %v2113 = vunpack.c.h.b16 %v2077
        %v2114 = vunpack.c.l.b16 %v2078
        %v2115 = vunpack.c.h.b16 %v2078
        %v2116 = vunpack.c.l.b16 %v2079
        %v2117 = vunpack.c.h.b16 %v2079
        %v2118 = vunpack.c.l.b16 %v2080
        %v2119 = vunpack.c.h.b16 %v2080
        %v2120 = vunpack.c.l.b16 %v2081
        %v2121 = vunpack.c.h.b16 %v2081
        %v2122 = vunpack.c.l.b16 %v2082
        %v2123 = vunpack.c.h.b16 %v2082
        %v2124 = vunpack.c.l.b16 %v2083
        %v2125 = vunpack.c.h.b16 %v2083
        %v2126 = vunpack.c.l.b16 %v2084
        %v2127 = vunpack.c.h.b16 %v2084
        %v2128 = vunpack.c.l.b16 %v2085
        %v2129 = vunpack.c.h.b16 %v2085
        %v2130 = vunpack.c.l.b16 %v2086
        %v2131 = vunpack.c.h.b16 %v2086
        %v2132 = vunpack.c.l.b16 %v2087
        %v2133 = vunpack.c.h.b16 %v2087
        %v2134 = vunpack.c.l.b16 %v2088
        %v2135 = vunpack.c.h.b16 %v2088
        %v2136 = vunpack.c.l.b16 %v2089
        %v2137 = vunpack.c.h.b16 %v2089
        %v2138 = vpack.c.b16 %v2106, %v2106
        %v2139 = vpack.c.b16 %v2107, %v2107
        %v2140 = vpack.c.b16 %v2108, %v2108
        %v2141 = vpack.c.b16 %v2109, %v2109
        %v2142 = vpack.c.b16 %v2110, %v2110
        %v2143 = vpack.c.b16 %v2111, %v2111
        %v2144 = vpack.c.b16 %v2112, %v2112
        %v2145 = vpack.c.b16 %v2113, %v2113
        %v2146 = vpack.c.b16 %v2114, %v2114
        %v2147 = vpack.c.b16 %v2115, %v2115
        %v2148 = vpack.c.b16 %v2116, %v2116
        %v2149 = vpack.c.b16 %v2117, %v2117
        %v2150 = vpack.c.b16 %v2118, %v2118
        %v2151 = vpack.c.b16 %v2119, %v2119
        %v2152 = vpack.c.b16 %v2120, %v2120
        %v2153 = vpack.c.b16 %v2121, %v2121
        %v2154 = vpack.c.b16 %v2122, %v2122
        %v2155 = vpack.c.b16 %v2123, %v2123
        %v2156 = vpack.c.b16 %v2124, %v2124
        %v2157 = vpack.c.b16 %v2125, %v2125
        %v2158 = vpack.c.b16 %v2126, %v2126
        %v2159 = vpack.c.b16 %v2127, %v2127
        %v2160 = vpack.c.b16 %v2128, %v2128
        %v2161 = vpack.c.b16 %v2129, %v2129
        %v2162 = vpack.c.b16 %v2130, %v2130
        %v2163 = vpack.c.b16 %v2131, %v2131
        %v2164 = vpack.c.b16 %v2132, %v2132
        %v2165 = vpack.c.b16 %v2133, %v2133
        %v2166 = vpack.c.b16 %v2134, %v2134
        %v2167 = vpack.c.b16 %v2135, %v2135
        %v2168 = vpack.c.b16 %v2136, %v2136
        %v2169 = vpack.c.b16 %v2137, %v2137
        %2202 = vst [vmem:[%s167] sm:$0xf] %v2138
        %2203 = vst [vmem:[%s167 + $0x4] sm:$0xf] %v2139
        %2204 = vst [vmem:[%s167 + $0x8] sm:$0xf] %v2140
        %2205 = vst [vmem:[%s167 + $0xc] sm:$0xf] %v2141
        %2206 = vst [vmem:[%s167 + $0x10] sm:$0xf] %v2142
        %2207 = vst [vmem:[%s167 + $0x14] sm:$0xf] %v2143
        %2208 = vst [vmem:[%s167 + $0x18] sm:$0xf] %v2144
        %2209 = vst [vmem:[%s167 + $0x1c] sm:$0xf] %v2145
        %2210 = vst [vmem:[%s167 + $0x20] sm:$0xf] %v2146
        %2211 = vst [vmem:[%s167 + $0x24] sm:$0xf] %v2147
        %2212 = vst [vmem:[%s167 + $0x28] sm:$0xf] %v2148
        %2213 = vst [vmem:[%s167 + $0x2c] sm:$0xf] %v2149
        %2214 = vst [vmem:[%s167 + $0x30] sm:$0xf] %v2150
        %2215 = vst [vmem:[%s167 + $0x34] sm:$0xf] %v2151
        %2216 = vst [vmem:[%s167 + $0x38] sm:$0xf] %v2152
        %2217 = vst [vmem:[%s167 + $0x3c] sm:$0xf] %v2153
        %2218 = vst [vmem:[%s167 + $0x40] sm:$0xf] %v2154
        %2219 = vst [vmem:[%s167 + $0x44] sm:$0xf] %v2155
        %2220 = vst [vmem:[%s167 + $0x48] sm:$0xf] %v2156
        %2221 = vst [vmem:[%s167 + $0x4c] sm:$0xf] %v2157
        %2222 = vst [vmem:[%s167 + $0x50] sm:$0xf] %v2158
        %2223 = vst [vmem:[%s167 + $0x54] sm:$0xf] %v2159
        %2224 = vst [vmem:[%s167 + $0x58] sm:$0xf] %v2160
        %2225 = vst [vmem:[%s167 + $0x5c] sm:$0xf] %v2161
        %2226 = vst [vmem:[%s167 + $0x60] sm:$0xf] %v2162
        %2227 = vst [vmem:[%s167 + $0x64] sm:$0xf] %v2163
        %2228 = vst [vmem:[%s167 + $0x68] sm:$0xf] %v2164
        %2229 = vst [vmem:[%s167 + $0x6c] sm:$0xf] %v2165
        %2230 = vst [vmem:[%s167 + $0x70] sm:$0xf] %v2166
        %2231 = vst [vmem:[%s167 + $0x74] sm:$0xf] %v2167
        %2232 = vst [vmem:[%s167 + $0x78] sm:$0xf] %v2168
        %2233 = vst [vmem:[%s167 + $0x7c] sm:$0xf] %v2169
        %v2234 = vadd.f32 %v1948, %v1951
        %v2235 = vadd.f32 %v2234, %v1956
        %v2236 = vadd.f32 %v2235, %v1959
        %v2237 = vadd.f32 %v2236, %v1964
        %v2238 = vadd.f32 %v2237, %v1967
        %v2239 = vadd.f32 %v2238, %v1972
        %v2240 = vadd.f32 %v2239, %v1975
        %v2241 = vadd.f32 %v2240, %v1980
        %v2242 = vadd.f32 %v2241, %v1983
        %v2243 = vadd.f32 %v2242, %v1988
        %v2244 = vadd.f32 %v2243, %v1991
        %v2245 = vadd.f32 %v2244, %v1996
        %v2246 = vadd.f32 %v2245, %v1999
        %v2247 = vadd.f32 %v2246, %v2004
        %v2248 = vadd.f32 %v2247, %v2007
        %v2249 = vadd.f32 %v2248, %v2012
        %v2250 = vadd.f32 %v2249, %v2015
        %v2251 = vadd.f32 %v2250, %v2020
        %v2252 = vadd.f32 %v2251, %v2023
        %v2253 = vadd.f32 %v2252, %v2028
        %v2254 = vadd.f32 %v2253, %v2031
        %v2255 = vadd.f32 %v2254, %v2036
        %v2256 = vadd.f32 %v2255, %v2039
        %v2257 = vadd.f32 %v2256, %v2044
        %v2258 = vadd.f32 %v2257, %v2047
        %v2259 = vadd.f32 %v2258, %v2052
        %v2260 = vadd.f32 %v2259, %v2055
        %v2261 = vadd.f32 %v2260, %v2060
        %v2262 = vadd.f32 %v2261, %v2063
        %v2263 = vadd.f32 %v2262, %v2068
        %v2264 = vadd.f32 %v2263, %v2071
        %v2265 = vrot.slane %v2264, 4
        %v2266 = vadd.f32 %v2264, %v2265
        %v2267 = vrot.slane %v2266, 2
        %v2268 = vadd.f32 %v2266, %v2267
        %v2269 = vrot.slane %v2268, 1
        %v2270 = vadd.f32 %v2268, %v2269
        %2271 = vst [vmem:[%s174] sm:$0x1] %v2270
        %v2272 = vmul.f32 %v1948, %v1948
        %v2273 = vmul.f32 %v1951, %v1951
        %v2274 = vmul.f32 %v1956, %v1956
        %v2275 = vmul.f32 %v1959, %v1959
        %v2276 = vmul.f32 %v1964, %v1964
        %v2277 = vmul.f32 %v1967, %v1967
        %v2278 = vmul.f32 %v1972, %v1972
        %v2279 = vmul.f32 %v1975, %v1975
        %v2280 = vmul.f32 %v1980, %v1980
        %v2281 = vmul.f32 %v1983, %v1983
        %v2282 = vmul.f32 %v1988, %v1988
        %v2283 = vmul.f32 %v1991, %v1991
        %v2284 = vmul.f32 %v1996, %v1996
        %v2285 = vmul.f32 %v1999, %v1999
        %v2286 = vmul.f32 %v2004, %v2004
        %v2287 = vmul.f32 %v2007, %v2007
        %v2288 = vmul.f32 %v2012, %v2012
        %v2289 = vmul.f32 %v2015, %v2015
        %v2290 = vmul.f32 %v2020, %v2020
        %v2291 = vmul.f32 %v2023, %v2023
        %v2292 = vmul.f32 %v2028, %v2028
        %v2293 = vmul.f32 %v2031, %v2031
        %v2294 = vmul.f32 %v2036, %v2036
        %v2295 = vmul.f32 %v2039, %v2039
        %v2296 = vmul.f32 %v2044, %v2044
        %v2297 = vmul.f32 %v2047, %v2047
        %v2298 = vmul.f32 %v2052, %v2052
        %v2299 = vmul.f32 %v2055, %v2055
        %v2300 = vmul.f32 %v2060, %v2060
        %v2301 = vmul.f32 %v2063, %v2063
        %v2302 = vmul.f32 %v2068, %v2068
        %v2303 = vmul.f32 %v2071, %v2071
        %v2304 = vadd.f32 %v2272, %v2273
        %v2305 = vadd.f32 %v2304, %v2274
        %v2306 = vadd.f32 %v2305, %v2275
        %v2307 = vadd.f32 %v2306, %v2276
        %v2308 = vadd.f32 %v2307, %v2277
        %v2309 = vadd.f32 %v2308, %v2278
        %v2310 = vadd.f32 %v2309, %v2279
        %v2311 = vadd.f32 %v2310, %v2280
        %v2312 = vadd.f32 %v2311, %v2281
        %v2313 = vadd.f32 %v2312, %v2282
        %v2314 = vadd.f32 %v2313, %v2283
        %v2315 = vadd.f32 %v2314, %v2284
        %v2316 = vadd.f32 %v2315, %v2285
        %v2317 = vadd.f32 %v2316, %v2286
        %v2318 = vadd.f32 %v2317, %v2287
        %v2319 = vadd.f32 %v2318, %v2288
        %v2320 = vadd.f32 %v2319, %v2289
        %v2321 = vadd.f32 %v2320, %v2290
        %v2322 = vadd.f32 %v2321, %v2291
        %v2323 = vadd.f32 %v2322, %v2292
        %v2324 = vadd.f32 %v2323, %v2293
        %v2325 = vadd.f32 %v2324, %v2294
        %v2326 = vadd.f32 %v2325, %v2295
        %v2327 = vadd.f32 %v2326, %v2296
        %v2328 = vadd.f32 %v2327, %v2297
        %v2329 = vadd.f32 %v2328, %v2298
        %v2330 = vadd.f32 %v2329, %v2299
        %v2331 = vadd.f32 %v2330, %v2300
        %v2332 = vadd.f32 %v2331, %v2301
        %v2333 = vadd.f32 %v2332, %v2302
        %v2334 = vadd.f32 %v2333, %v2303
        %v2335 = vrot.slane %v2334, 4
        %v2336 = vadd.f32 %v2334, %v2335
        %v2337 = vrot.slane %v2336, 2
        %v2338 = vadd.f32 %v2336, %v2337
        %v2339 = vrot.slane %v2338, 1
        %v2340 = vadd.f32 %v2338, %v2339
        %2341 = vst [vmem:[%s174 + $0x1] sm:$0x1] %v2340
        %s2342 = sand.u32 %s76, 1
        %s2343 = scalar_lea.sflag [#allocation4], %s2342
        %s2344 = sand.u32 %s76, 1
        %s2345 = smul.addr %s2344, 128
        %s2346 = scalar_lea.vmem [#allocation3], %s2345
        %s2347 = sand.u32 %s102, 1
        %s2348 = scalar_lea.sflag [#allocation6], %s2347
        %s2349 = sand.u32 %s102, 1
        %s2350 = smul.addr %s2349, 2
        %s2351 = scalar_lea.vmem [#allocation5], %s2350
        // Predicated region
        $region29: #{tpu_custom_call.1} parent=27 // pred_check
          %p2352 = pneg %p86
        $region30: #{tpu_custom_call.1} parent=27 // pred_check_branch
          %2354 = sbr.rel (%p2352) target = $region32
        $region31: #{tpu_custom_call.1} parent=27 // pred_region
          %s2356 = ssub.s32 2048, 2048
          %2357 = vsyncadd %s2343, %s2356
          %s2358 = smul.addr %s21, 32
          %s2359 = smul.addr %s2358, 64
          %s2360 = scalar_lea.hbm %s2, %s2359
          %s2361 = sshll.u32 %s2346, 4
          %s2362 = int_to_ptr.vmem [resolvable:$true] %s2361
          %2367 = dma.vmem_to_hbm [thread:$0]  %s2362, 2048, %s2360, %s2343, 64, 64, 4
        $region32: #{tpu_custom_call.1} parent=27 // pred_fallthru
          _
        // Predicated region
        $region33: #{tpu_custom_call.1} parent=27 // pred_check
          %p2368 = pneg %p112
        $region34: #{tpu_custom_call.1} parent=27 // pred_check_branch
          %2370 = sbr.rel (%p2368) target = $region36
        $region35: #{tpu_custom_call.1} parent=27 // pred_region
          %s2372 = ssub.s32 32, 32
          %2373 = vsyncadd %s2348, %s2372
          %s2374 = smul.addr %s21, 32
          %s2375 = scalar_lea.hbm %s3, %s2374
          %s2377 = sshll.u32 %s2351, 4
          %s2378 = int_to_ptr.vmem [resolvable:$true] %s2377
          %2380 = dma.vmem_to_hbm [thread:$0]  %s2378, 32, %s2375, %s2348
        $region36: #{tpu_custom_call.1} parent=27 // pred_fallthru
          _
      $region28: #{tpu_custom_call.1} parent=5 // pred_fallthru
        _
      %p2381 = scmp.le.s32.totalorder 2, %s16
      // Predicated region
      $region37: #{tpu_custom_call.1} parent=5 // pred_check
        %p2382 = pneg %p2381
      $region38: #{tpu_custom_call.1} parent=5 // pred_check_branch
        %2384 = sbr.rel (%p2382) target = $region40
      $region39: #{tpu_custom_call.1} parent=5 // pred_region
        %s2385 = ssub.s32 %s16, 2
        // Predicated region
        $region41: #{tpu_custom_call.1} parent=39 // pred_check
          %p2386 = pneg %p92
        $region42: #{tpu_custom_call.1} parent=39 // pred_check_branch
          %2388 = sbr.rel (%p2386) target = $region44
        $region43: #{tpu_custom_call.1} parent=39 // pred_region
          %s2389 = sand.u32 %s77, 1
          %s2390 = scalar_lea.sflag [#allocation4], %s2389
          %s2391 = sand.u32 %s77, 1
          %s2392 = smul.addr %s2391, 128
          %s2393 = scalar_lea.vmem [#allocation3], %s2392
          %2394 = dma.done %s2390, 2048
        $region44: #{tpu_custom_call.1} parent=39 // pred_fallthru
          _
        // Predicated region
        $region45: #{tpu_custom_call.1} parent=39 // pred_check
          %p2395 = pneg %p118
        $region46: #{tpu_custom_call.1} parent=39 // pred_check_branch
          %2397 = sbr.rel (%p2395) target = $region48
        $region47: #{tpu_custom_call.1} parent=39 // pred_region
          %s2398 = sand.u32 %s103, 1
          %s2399 = scalar_lea.sflag [#allocation6], %s2398
          %s2400 = sand.u32 %s103, 1
          %s2401 = smul.addr %s2400, 2
          %s2402 = scalar_lea.vmem [#allocation5], %s2401
          %2403 = dma.done %s2399, 32
        $region48: #{tpu_custom_call.1} parent=39 // pred_fallthru
          _
      $region40: #{tpu_custom_call.1} parent=5 // pred_fallthru
        _
    $region6: #{tpu_custom_call.1} parent=1 // loop_footer
      %s20 = sadd.s32 1, %s16
    $region7: #{tpu_custom_call.1} parent=1 // loop_footer_branch
      %15 = sbr.rel target = $region3
    $region8: #{tpu_custom_call.1} parent=1 // loop_exit
      _
    %2404 = vsyncpa [#allocation4], 1
    %s2405 = scalar_lea.sflag [#allocation4], 1
    %2406 = vsyncpa %s2405, 1
    %2407 = vsyncpa [#allocation6], 1
    %s2408 = scalar_lea.sflag [#allocation6], 1
    %2409 = vsyncpa %s2408, 1

</llo_original>
